<compile_context>
chip_gen: v7x
topology: tpu7x:2x2x1
jax: 0.10.0
libtpu: 0.0.40
codegen_flags: <defaults>
</compile_context>

<pallas_src>
import jax
import jax.numpy as jnp
from jax import lax
from jax.experimental import pallas as pl
from jax.experimental.pallas import tpu as pltpu


def lstm_fc_kernel(x_ref, wih0_ref, whh0_ref, b0_ref, w1_ref, b1_ref,
                   fcw_ref, fcb_ref, out_ref, pre0_scr):
    # x_ref:    (T, B, D)   time-major, batch padded to a multiple of 8
    # wih0_ref: (D, 4H)     layer-0 input weights, pre-transposed
    # whh0_ref: (H, 4H)     layer-0 recurrent weights, pre-transposed
    # b0_ref:   (1, 4H)     layer-0 combined bias (b_ih + b_hh)
    # w1_ref:   (2H, 4H)    layer-1 packed [W_ih1 ; W_hh1], pre-transposed
    # b1_ref:   (1, 4H)     layer-1 combined bias
    # fcw_ref:  (H, O)      fc weight, pre-transposed;  fcb_ref: (1, O)
    # out_ref:  (B, O)
    # pre0_scr: (T, B, 4H)  VMEM scratch holding the hoisted layer-0 projection
    T, B, D = x_ref.shape
    H = whh0_ref.shape[0]
    H4 = 4 * H

    whh0 = whh0_ref[...]                                   # (H, 4H)
    w1 = w1_ref[...]                                       # (2H, 4H)

    # ---- hoisted layer-0 input projection: no recurrent dependency ----
    # One (T*B, D) @ (D, 4H) matmul instead of T tiny matmuls on the serial
    # path; b0 folded in here (broadcast happens exactly once).
    x_all = x_ref[...].reshape(T * B, D)
    pre0_scr[...] = (jnp.dot(x_all, wih0_ref[...],
                             preferred_element_type=jnp.float32)
                     + b0_ref[...]).reshape(T, B, H4)

    # ---- hoisted bias broadcast (JAX does not CSE broadcast_in_dim) ----
    b1_b = jnp.broadcast_to(b1_ref[...], (B, H4))

    def gates(pre):
        # NOTE: at H=32 each gate slice is 32 lanes (masked VPU/EUP ops);
        # lane-dense only if hidden_dim is a multiple of 128.
        i = jax.nn.sigmoid(pre[:, 0 * H:1 * H])
        f = jax.nn.sigmoid(pre[:, 1 * H:2 * H])
        g = jnp.tanh(pre[:, 2 * H:3 * H])
        o = jax.nn.sigmoid(pre[:, 3 * H:4 * H])
        return i, f, g, o

    def step(t, carry):
        h0, c0, h1, c1 = carry
        # Layer 0: only the recurrent matmul remains on the serial path.
        pre0 = pre0_scr[t] + jnp.dot(h0, whh0,
                                     preferred_element_type=jnp.float32)
        i0, f0, g0, o0 = gates(pre0)
        c0 = f0 * c0 + i0 * g0
        h0 = o0 * jnp.tanh(c0)
        # Layer 1: single fused matmul over [h0 | h1_prev].
        # TODO(synk): nn.LSTM inter-layer dropout is training-only; eval
        # semantics (identity) are implemented here.
        xh = jnp.concatenate([h0, h1], axis=1)             # (B, 2H)
        pre1 = jnp.dot(xh, w1, preferred_element_type=jnp.float32) + b1_b
        i1, f1, g1, o1 = gates(pre1)
        c1 = f1 * c1 + i1 * g1
        h1 = o1 * jnp.tanh(c1)
        return h0, c0, h1, c1

    zeros = jnp.zeros((B, H), jnp.float32)
    # T is small and static -> fully unroll so MXU pops / EUP sigmoid-tanh /
    # VPU gating of adjacent timesteps can interleave.
    _, _, h1_last, _ = lax.fori_loop(0, T, step,
                                     (zeros, zeros, zeros, zeros),
                                     unroll=True)

    # fc on the last-timestep hidden state of the top layer.
    # (O=1 is a masked 1-lane store; negligible at this size.)
    out_ref[...] = (jnp.dot(h1_last, fcw_ref[...],
                            preferred_element_type=jnp.float32)
                    + fcb_ref[...])


def lstm_model_forward(x, params):
    """x: (B, T, D) batch-first, matching the PyTorch module. Returns (B, O)."""
    B, T, D = x.shape
    H = params["whh0"].shape[1]
    O = params["fcw"].shape[0]

    # Pad batch to the f32 sublane height so every vreg / MXU row is full.
    B_pad = max(8, ((B + 7) // 8) * 8)

    x_tm = jnp.transpose(x, (1, 0, 2))                      # (T, B, D) time-major
    if B_pad != B:
        x_tm = jnp.pad(x_tm, ((0, 0), (0, B_pad - B), (0, 0)))

    # Wrapper-side weight packing (free at param-prep time):
    #   transpose everything to lane-major RHS layouts, stack layer-1 weights
    #   so the cell does one fused matmul.
    wih0_t = jnp.transpose(params["wih0"])                  # (D, 4H)
    whh0_t = jnp.transpose(params["whh0"])                  # (H, 4H)
    w1 = jnp.concatenate([jnp.transpose(params["wih1"]),
                          jnp.transpose(params["whh1"])], axis=0)   # (2H, 4H)
    fcw_t = jnp.transpose(params["fcw"])                    # (H, O)

    vmem = pl.BlockSpec(memory_space=pltpu.MemorySpace.VMEM)
    out_pad = pl.pallas_call(
        lstm_fc_kernel,
        out_shape=jax.ShapeDtypeStruct((B_pad, O), jnp.float32),
        in_specs=[vmem] * 8,
        out_specs=vmem,
        scratch_shapes=[pltpu.VMEM((T, B_pad, 4 * H), jnp.float32)],
    )(x_tm, wih0_t, whh0_t, params["b0"], w1, params["b1"], fcw_t, params["fcb"])

    return out_pad[:B]


# ----------------- deterministic parameter initialization -----------------

def xavier_uniform(key, shape):
    fan_out, fan_in = shape
    limit = jnp.sqrt(6.0 / (fan_in + fan_out))
    return jax.random.uniform(key, shape, jnp.float32, -limit, limit)


def orthogonal(key, shape):
    rows, cols = shape
    a = jax.random.normal(key, (max(rows, cols), min(rows, cols)), jnp.float32)
    q, r = jnp.linalg.qr(a)
    q = q * jnp.sign(jnp.diagonal(r))[None, :]
    if rows < cols:
        q = q.T
    return q[:rows, :cols].astype(jnp.float32)


def init_params(key, input_dim, hidden_dim, output_dim):
    k = jax.random.split(key, 6)
    H = hidden_dim
    return {
        # layer 0 (PyTorch layout: W_ih (4H, D), W_hh (4H, H), gates [i,f,g,o])
        "wih0": xavier_uniform(k[0], (4 * H, input_dim)),
        "whh0": orthogonal(k[1], (4 * H, H)),
        "b0": jnp.zeros((1, 4 * H), jnp.float32),           # b_ih + b_hh, both zero
        # layer 1
        "wih1": xavier_uniform(k[2], (4 * H, H)),
        "whh1": orthogonal(k[3], (4 * H, H)),
        "b1": jnp.zeros((1, 4 * H), jnp.float32),
        # fc
        "fcw": xavier_uniform(k[4], (output_dim, H)),
        "fcb": jnp.zeros((1, output_dim), jnp.float32),
    }


if __name__ == "__main__":
    B, T, D = 2, 8, 8          # batch, seq_len, input_dim
    H, O = 32, 1               # hidden_dim, output_dim

    key = jax.random.PRNGKey(0)
    kx, kp = jax.random.split(key)
    x = jax.random.normal(kx, (B, T, D), jnp.float32)
    params = init_params(kp, D, H, O)

    out = jax.jit(lstm_model_forward)(x, params)
    jax.block_until_ready(out)
    assert out.shape == (B, O)
    print("KERNEL_OK")
</pallas_src>

<mosaic_0001>
module attributes {stable_mosaic.version = 11 : i64} {
  func.func @lstm_fc_kernel(%arg0: memref<8x8x8xf32, #tpu.memory_space<vmem>>, %arg1: memref<8x128xf32, #tpu.memory_space<vmem>>, %arg2: memref<32x128xf32, #tpu.memory_space<vmem>>, %arg3: memref<1x128xf32, #tpu.memory_space<vmem>>, %arg4: memref<64x128xf32, #tpu.memory_space<vmem>>, %arg5: memref<1x128xf32, #tpu.memory_space<vmem>>, %arg6: memref<32x1xf32, #tpu.memory_space<vmem>>, %arg7: memref<1x1xf32, #tpu.memory_space<vmem>>, %arg8: memref<8x1xf32, #tpu.memory_space<vmem>>, %arg9: memref<8x8x128xf32, #tpu.memory_space<vmem>>) attributes {dimension_semantics = [], scalar_prefetch = 0 : i64, scratch_operands = 1 : i64, tpu.core_type = #tpu.core_type<tc>} {
    %c0 = arith.constant 0 : index
    %c0_0 = arith.constant 0 : index
    %0 = vector.load %arg2[%c0, %c0_0] : memref<32x128xf32, #tpu.memory_space<vmem>>, vector<32x128xf32>
    %c0_1 = arith.constant 0 : index
    %c0_2 = arith.constant 0 : index
    %1 = vector.load %arg4[%c0_1, %c0_2] : memref<64x128xf32, #tpu.memory_space<vmem>>, vector<64x128xf32>
    %c0_3 = arith.constant 0 : index
    %c0_4 = arith.constant 0 : index
    %c0_5 = arith.constant 0 : index
    %2 = vector.load %arg0[%c0_3, %c0_4, %c0_5] : memref<8x8x8xf32, #tpu.memory_space<vmem>>, vector<8x8x8xf32>
    %3 = vector.shape_cast %2 : vector<8x8x8xf32> to vector<64x8xf32>
    %c0_6 = arith.constant 0 : index
    %c0_7 = arith.constant 0 : index
    %4 = vector.load %arg1[%c0_6, %c0_7] : memref<8x128xf32, #tpu.memory_space<vmem>>, vector<8x128xf32>
    %cst = arith.constant dense<0.000000e+00> : vector<64x128xf32>
    %5 = tpu.matmul %3, %4, %cst {dimension_numbers = #tpu.dot_dimension_numbers<[1], [0], [0], [1], [0, 0, 1, 1], [], []>} : vector<64x8xf32>, vector<8x128xf32>, vector<64x128xf32> -> vector<64x128xf32>
    %c0_8 = arith.constant 0 : index
    %c0_9 = arith.constant 0 : index
    %6 = vector.load %arg3[%c0_8, %c0_9] : memref<1x128xf32, #tpu.memory_space<vmem>>, vector<1x128xf32>
    %7 = vector.broadcast %6 : vector<1x128xf32> to vector<64x128xf32>
    %8 = arith.addf %5, %7 : vector<64x128xf32>
    %9 = vector.shape_cast %8 : vector<64x128xf32> to vector<8x8x128xf32>
    %c0_10 = arith.constant 0 : index
    %c0_11 = arith.constant 0 : index
    %c0_12 = arith.constant 0 : index
    %10 = vector.load %arg9[%c0_10, %c0_11, %c0_12] : memref<8x8x128xf32, #tpu.memory_space<vmem>>, vector<8x8x128xf32>
    tpu.vector_store %arg9[%c0_10, %c0_11, %c0_12], %9 {strides = array<i32>} : memref<8x8x128xf32, #tpu.memory_space<vmem>>, vector<8x8x128xf32>,
    %c0_13 = arith.constant 0 : index
    %c0_14 = arith.constant 0 : index
    %11 = vector.load %arg5[%c0_13, %c0_14] : memref<1x128xf32, #tpu.memory_space<vmem>>, vector<1x128xf32>
    %12 = vector.shape_cast %11 : vector<1x128xf32> to vector<1x128xf32>
    %13 = vector.broadcast %12 : vector<1x128xf32> to vector<8x128xf32>
    %cst_15 = arith.constant 0.000000e+00 : f32
    %14 = vector.broadcast %cst_15 : f32 to vector<8x32xf32>
    %c0_i32 = arith.constant 0 : i32
    %15 = arith.index_cast %c0_i32 : i32 to index
    %c0_16 = arith.constant 0 : index
    %c0_17 = arith.constant 0 : index
    %16 = vector.load %arg9[%15, %c0_16, %c0_17] : memref<8x8x128xf32, #tpu.memory_space<vmem>>, vector<1x8x128xf32>
    %17 = vector.shape_cast %16 : vector<1x8x128xf32> to vector<8x128xf32>
    %cst_18 = arith.constant dense<0.000000e+00> : vector<8x128xf32>
    %18 = tpu.matmul %14, %0, %cst_18 {dimension_numbers = #tpu.dot_dimension_numbers<[1], [0], [0], [1], [0, 0, 1, 1], [], []>} : vector<8x32xf32>, vector<32x128xf32>, vector<8x128xf32> -> vector<8x128xf32>
    %19 = arith.addf %17, %18 : vector<8x128xf32>
    %20 = vector.extract_strided_slice %19 {offsets = [0, 0], sizes = [8, 32], strides = [1, 1]} : vector<8x128xf32> to vector<8x32xf32>
    %21 = arith.negf %20 : vector<8x32xf32>
    %22 = math.exp %21 : vector<8x32xf32>
    %cst_19 = arith.constant 1.000000e+00 : f32
    %23 = vector.broadcast %cst_19 : f32 to vector<8x32xf32>
    %24 = arith.addf %23, %22 : vector<8x32xf32>
    %25 = arith.divf %23, %24 : vector<8x32xf32>
    %26 = vector.extract_strided_slice %19 {offsets = [0, 32], sizes = [8, 32], strides = [1, 1]} : vector<8x128xf32> to vector<8x32xf32>
    %27 = arith.negf %26 : vector<8x32xf32>
    %28 = math.exp %27 : vector<8x32xf32>
    %cst_20 = arith.constant 1.000000e+00 : f32
    %29 = vector.broadcast %cst_20 : f32 to vector<8x32xf32>
    %30 = arith.addf %29, %28 : vector<8x32xf32>
    %31 = arith.divf %29, %30 : vector<8x32xf32>
    %32 = vector.extract_strided_slice %19 {offsets = [0, 64], sizes = [8, 32], strides = [1, 1]} : vector<8x128xf32> to vector<8x32xf32>
    %33 = math.tanh %32 : vector<8x32xf32>
    %34 = vector.extract_strided_slice %19 {offsets = [0, 96], sizes = [8, 32], strides = [1, 1]} : vector<8x128xf32> to vector<8x32xf32>
    %35 = arith.negf %34 : vector<8x32xf32>
    %36 = math.exp %35 : vector<8x32xf32>
    %cst_21 = arith.constant 1.000000e+00 : f32
    %37 = vector.broadcast %cst_21 : f32 to vector<8x32xf32>
    %38 = arith.addf %37, %36 : vector<8x32xf32>
    %39 = arith.divf %37, %38 : vector<8x32xf32>
    %40 = arith.mulf %31, %14 : vector<8x32xf32>
    %41 = arith.mulf %25, %33 : vector<8x32xf32>
    %42 = arith.addf %40, %41 : vector<8x32xf32>
    %43 = math.tanh %42 : vector<8x32xf32>
    %44 = arith.mulf %39, %43 : vector<8x32xf32>
    %45 = tpu.concatenate %44, %14 in 1 : vector<8x32xf32>, vector<8x32xf32> -> vector<8x64xf32>
    %cst_22 = arith.constant dense<0.000000e+00> : vector<8x128xf32>
    %46 = tpu.matmul %45, %1, %cst_22 {dimension_numbers = #tpu.dot_dimension_numbers<[1], [0], [0], [1], [0, 0, 1, 1], [], []>} : vector<8x64xf32>, vector<64x128xf32>, vector<8x128xf32> -> vector<8x128xf32>
    %47 = arith.addf %46, %13 : vector<8x128xf32>
    %48 = vector.extract_strided_slice %47 {offsets = [0, 0], sizes = [8, 32], strides = [1, 1]} : vector<8x128xf32> to vector<8x32xf32>
    %49 = arith.negf %48 : vector<8x32xf32>
    %50 = math.exp %49 : vector<8x32xf32>
    %cst_23 = arith.constant 1.000000e+00 : f32
    %51 = vector.broadcast %cst_23 : f32 to vector<8x32xf32>
    %52 = arith.addf %51, %50 : vector<8x32xf32>
    %53 = arith.divf %51, %52 : vector<8x32xf32>
    %54 = vector.extract_strided_slice %47 {offsets = [0, 32], sizes = [8, 32], strides = [1, 1]} : vector<8x128xf32> to vector<8x32xf32>
    %55 = arith.negf %54 : vector<8x32xf32>
    %56 = math.exp %55 : vector<8x32xf32>
    %cst_24 = arith.constant 1.000000e+00 : f32
    %57 = vector.broadcast %cst_24 : f32 to vector<8x32xf32>
    %58 = arith.addf %57, %56 : vector<8x32xf32>
    %59 = arith.divf %57, %58 : vector<8x32xf32>
    %60 = vector.extract_strided_slice %47 {offsets = [0, 64], sizes = [8, 32], strides = [1, 1]} : vector<8x128xf32> to vector<8x32xf32>
    %61 = math.tanh %60 : vector<8x32xf32>
    %62 = vector.extract_strided_slice %47 {offsets = [0, 96], sizes = [8, 32], strides = [1, 1]} : vector<8x128xf32> to vector<8x32xf32>
    %63 = arith.negf %62 : vector<8x32xf32>
    %64 = math.exp %63 : vector<8x32xf32>
    %cst_25 = arith.constant 1.000000e+00 : f32
    %65 = vector.broadcast %cst_25 : f32 to vector<8x32xf32>
    %66 = arith.addf %65, %64 : vector<8x32xf32>
    %67 = arith.divf %65, %66 : vector<8x32xf32>
    %68 = arith.mulf %59, %14 : vector<8x32xf32>
    %69 = arith.mulf %53, %61 : vector<8x32xf32>
    %70 = arith.addf %68, %69 : vector<8x32xf32>
    %71 = math.tanh %70 : vector<8x32xf32>
    %72 = arith.mulf %67, %71 : vector<8x32xf32>
    %c1_i32 = arith.constant 1 : i32
    %73 = arith.index_cast %c1_i32 : i32 to index
    %c0_26 = arith.constant 0 : index
    %c0_27 = arith.constant 0 : index
    %74 = vector.load %arg9[%73, %c0_26, %c0_27] : memref<8x8x128xf32, #tpu.memory_space<vmem>>, vector<1x8x128xf32>
    %75 = vector.shape_cast %74 : vector<1x8x128xf32> to vector<8x128xf32>
    %cst_28 = arith.constant dense<0.000000e+00> : vector<8x128xf32>
    %76 = tpu.matmul %44, %0, %cst_28 {dimension_numbers = #tpu.dot_dimension_numbers<[1], [0], [0], [1], [0, 0, 1, 1], [], []>} : vector<8x32xf32>, vector<32x128xf32>, vector<8x128xf32> -> vector<8x128xf32>
    %77 = arith.addf %75, %76 : vector<8x128xf32>
    %78 = vector.extract_strided_slice %77 {offsets = [0, 0], sizes = [8, 32], strides = [1, 1]} : vector<8x128xf32> to vector<8x32xf32>
    %79 = arith.negf %78 : vector<8x32xf32>
    %80 = math.exp %79 : vector<8x32xf32>
    %cst_29 = arith.constant 1.000000e+00 : f32
    %81 = vector.broadcast %cst_29 : f32 to vector<8x32xf32>
    %82 = arith.addf %81, %80 : vector<8x32xf32>
    %83 = arith.divf %81, %82 : vector<8x32xf32>
    %84 = vector.extract_strided_slice %77 {offsets = [0, 32], sizes = [8, 32], strides = [1, 1]} : vector<8x128xf32> to vector<8x32xf32>
    %85 = arith.negf %84 : vector<8x32xf32>
    %86 = math.exp %85 : vector<8x32xf32>
    %cst_30 = arith.constant 1.000000e+00 : f32
    %87 = vector.broadcast %cst_30 : f32 to vector<8x32xf32>
    %88 = arith.addf %87, %86 : vector<8x32xf32>
    %89 = arith.divf %87, %88 : vector<8x32xf32>
    %90 = vector.extract_strided_slice %77 {offsets = [0, 64], sizes = [8, 32], strides = [1, 1]} : vector<8x128xf32> to vector<8x32xf32>
    %91 = math.tanh %90 : vector<8x32xf32>
    %92 = vector.extract_strided_slice %77 {offsets = [0, 96], sizes = [8, 32], strides = [1, 1]} : vector<8x128xf32> to vector<8x32xf32>
    %93 = arith.negf %92 : vector<8x32xf32>
    %94 = math.exp %93 : vector<8x32xf32>
    %cst_31 = arith.constant 1.000000e+00 : f32
    %95 = vector.broadcast %cst_31 : f32 to vector<8x32xf32>
    %96 = arith.addf %95, %94 : vector<8x32xf32>
    %97 = arith.divf %95, %96 : vector<8x32xf32>
    %98 = arith.mulf %89, %42 : vector<8x32xf32>
    %99 = arith.mulf %83, %91 : vector<8x32xf32>
    %100 = arith.addf %98, %99 : vector<8x32xf32>
    %101 = math.tanh %100 : vector<8x32xf32>
    %102 = arith.mulf %97, %101 : vector<8x32xf32>
    %103 = tpu.concatenate %102, %72 in 1 : vector<8x32xf32>, vector<8x32xf32> -> vector<8x64xf32>
    %cst_32 = arith.constant dense<0.000000e+00> : vector<8x128xf32>
    %104 = tpu.matmul %103, %1, %cst_32 {dimension_numbers = #tpu.dot_dimension_numbers<[1], [0], [0], [1], [0, 0, 1, 1], [], []>} : vector<8x64xf32>, vector<64x128xf32>, vector<8x128xf32> -> vector<8x128xf32>
    %105 = arith.addf %104, %13 : vector<8x128xf32>
    %106 = vector.extract_strided_slice %105 {offsets = [0, 0], sizes = [8, 32], strides = [1, 1]} : vector<8x128xf32> to vector<8x32xf32>
    %107 = arith.negf %106 : vector<8x32xf32>
    %108 = math.exp %107 : vector<8x32xf32>
    %cst_33 = arith.constant 1.000000e+00 : f32
    %109 = vector.broadcast %cst_33 : f32 to vector<8x32xf32>
    %110 = arith.addf %109, %108 : vector<8x32xf32>
    %111 = arith.divf %109, %110 : vector<8x32xf32>
    %112 = vector.extract_strided_slice %105 {offsets = [0, 32], sizes = [8, 32], strides = [1, 1]} : vector<8x128xf32> to vector<8x32xf32>
    %113 = arith.negf %112 : vector<8x32xf32>
    %114 = math.exp %113 : vector<8x32xf32>
    %cst_34 = arith.constant 1.000000e+00 : f32
    %115 = vector.broadcast %cst_34 : f32 to vector<8x32xf32>
    %116 = arith.addf %115, %114 : vector<8x32xf32>
    %117 = arith.divf %115, %116 : vector<8x32xf32>
    %118 = vector.extract_strided_slice %105 {offsets = [0, 64], sizes = [8, 32], strides = [1, 1]} : vector<8x128xf32> to vector<8x32xf32>
    %119 = math.tanh %118 : vector<8x32xf32>
    %120 = vector.extract_strided_slice %105 {offsets = [0, 96], sizes = [8, 32], strides = [1, 1]} : vector<8x128xf32> to vector<8x32xf32>
    %121 = arith.negf %120 : vector<8x32xf32>
    %122 = math.exp %121 : vector<8x32xf32>
    %cst_35 = arith.constant 1.000000e+00 : f32
    %123 = vector.broadcast %cst_35 : f32 to vector<8x32xf32>
    %124 = arith.addf %123, %122 : vector<8x32xf32>
    %125 = arith.divf %123, %124 : vector<8x32xf32>
    %126 = arith.mulf %117, %70 : vector<8x32xf32>
    %127 = arith.mulf %111, %119 : vector<8x32xf32>
    %128 = arith.addf %126, %127 : vector<8x32xf32>
    %129 = math.tanh %128 : vector<8x32xf32>
    %130 = arith.mulf %125, %129 : vector<8x32xf32>
    %c2_i32 = arith.constant 2 : i32
    %131 = arith.index_cast %c2_i32 : i32 to index
    %c0_36 = arith.constant 0 : index
    %c0_37 = arith.constant 0 : index
    %132 = vector.load %arg9[%131, %c0_36, %c0_37] : memref<8x8x128xf32, #tpu.memory_space<vmem>>, vector<1x8x128xf32>
    %133 = vector.shape_cast %132 : vector<1x8x128xf32> to vector<8x128xf32>
    %cst_38 = arith.constant dense<0.000000e+00> : vector<8x128xf32>
    %134 = tpu.matmul %102, %0, %cst_38 {dimension_numbers = #tpu.dot_dimension_numbers<[1], [0], [0], [1], [0, 0, 1, 1], [], []>} : vector<8x32xf32>, vector<32x128xf32>, vector<8x128xf32> -> vector<8x128xf32>
    %135 = arith.addf %133, %134 : vector<8x128xf32>
    %136 = vector.extract_strided_slice %135 {offsets = [0, 0], sizes = [8, 32], strides = [1, 1]} : vector<8x128xf32> to vector<8x32xf32>
    %137 = arith.negf %136 : vector<8x32xf32>
    %138 = math.exp %137 : vector<8x32xf32>
    %cst_39 = arith.constant 1.000000e+00 : f32
    %139 = vector.broadcast %cst_39 : f32 to vector<8x32xf32>
    %140 = arith.addf %139, %138 : vector<8x32xf32>
    %141 = arith.divf %139, %140 : vector<8x32xf32>
    %142 = vector.extract_strided_slice %135 {offsets = [0, 32], sizes = [8, 32], strides = [1, 1]} : vector<8x128xf32> to vector<8x32xf32>
    %143 = arith.negf %142 : vector<8x32xf32>
    %144 = math.exp %143 : vector<8x32xf32>
    %cst_40 = arith.constant 1.000000e+00 : f32
    %145 = vector.broadcast %cst_40 : f32 to vector<8x32xf32>
    %146 = arith.addf %145, %144 : vector<8x32xf32>
    %147 = arith.divf %145, %146 : vector<8x32xf32>
    %148 = vector.extract_strided_slice %135 {offsets = [0, 64], sizes = [8, 32], strides = [1, 1]} : vector<8x128xf32> to vector<8x32xf32>
    %149 = math.tanh %148 : vector<8x32xf32>
    %150 = vector.extract_strided_slice %135 {offsets = [0, 96], sizes = [8, 32], strides = [1, 1]} : vector<8x128xf32> to vector<8x32xf32>
    %151 = arith.negf %150 : vector<8x32xf32>
    %152 = math.exp %151 : vector<8x32xf32>
    %cst_41 = arith.constant 1.000000e+00 : f32
    %153 = vector.broadcast %cst_41 : f32 to vector<8x32xf32>
    %154 = arith.addf %153, %152 : vector<8x32xf32>
    %155 = arith.divf %153, %154 : vector<8x32xf32>
    %156 = arith.mulf %147, %100 : vector<8x32xf32>
    %157 = arith.mulf %141, %149 : vector<8x32xf32>
    %158 = arith.addf %156, %157 : vector<8x32xf32>
    %159 = math.tanh %158 : vector<8x32xf32>
    %160 = arith.mulf %155, %159 : vector<8x32xf32>
    %161 = tpu.concatenate %160, %130 in 1 : vector<8x32xf32>, vector<8x32xf32> -> vector<8x64xf32>
    %cst_42 = arith.constant dense<0.000000e+00> : vector<8x128xf32>
    %162 = tpu.matmul %161, %1, %cst_42 {dimension_numbers = #tpu.dot_dimension_numbers<[1], [0], [0], [1], [0, 0, 1, 1], [], []>} : vector<8x64xf32>, vector<64x128xf32>, vector<8x128xf32> -> vector<8x128xf32>
    %163 = arith.addf %162, %13 : vector<8x128xf32>
    %164 = vector.extract_strided_slice %163 {offsets = [0, 0], sizes = [8, 32], strides = [1, 1]} : vector<8x128xf32> to vector<8x32xf32>
    %165 = arith.negf %164 : vector<8x32xf32>
    %166 = math.exp %165 : vector<8x32xf32>
    %cst_43 = arith.constant 1.000000e+00 : f32
    %167 = vector.broadcast %cst_43 : f32 to vector<8x32xf32>
    %168 = arith.addf %167, %166 : vector<8x32xf32>
    %169 = arith.divf %167, %168 : vector<8x32xf32>
    %170 = vector.extract_strided_slice %163 {offsets = [0, 32], sizes = [8, 32], strides = [1, 1]} : vector<8x128xf32> to vector<8x32xf32>
    %171 = arith.negf %170 : vector<8x32xf32>
    %172 = math.exp %171 : vector<8x32xf32>
    %cst_44 = arith.constant 1.000000e+00 : f32
    %173 = vector.broadcast %cst_44 : f32 to vector<8x32xf32>
    %174 = arith.addf %173, %172 : vector<8x32xf32>
    %175 = arith.divf %173, %174 : vector<8x32xf32>
    %176 = vector.extract_strided_slice %163 {offsets = [0, 64], sizes = [8, 32], strides = [1, 1]} : vector<8x128xf32> to vector<8x32xf32>
    %177 = math.tanh %176 : vector<8x32xf32>
    %178 = vector.extract_strided_slice %163 {offsets = [0, 96], sizes = [8, 32], strides = [1, 1]} : vector<8x128xf32> to vector<8x32xf32>
    %179 = arith.negf %178 : vector<8x32xf32>
    %180 = math.exp %179 : vector<8x32xf32>
    %cst_45 = arith.constant 1.000000e+00 : f32
    %181 = vector.broadcast %cst_45 : f32 to vector<8x32xf32>
    %182 = arith.addf %181, %180 : vector<8x32xf32>
    %183 = arith.divf %181, %182 : vector<8x32xf32>
    %184 = arith.mulf %175, %128 : vector<8x32xf32>
    %185 = arith.mulf %169, %177 : vector<8x32xf32>
    %186 = arith.addf %184, %185 : vector<8x32xf32>
    %187 = math.tanh %186 : vector<8x32xf32>
    %188 = arith.mulf %183, %187 : vector<8x32xf32>
    %c3_i32 = arith.constant 3 : i32
    %189 = arith.index_cast %c3_i32 : i32 to index
    %c0_46 = arith.constant 0 : index
    %c0_47 = arith.constant 0 : index
    %190 = vector.load %arg9[%189, %c0_46, %c0_47] : memref<8x8x128xf32, #tpu.memory_space<vmem>>, vector<1x8x128xf32>
    %191 = vector.shape_cast %190 : vector<1x8x128xf32> to vector<8x128xf32>
    %cst_48 = arith.constant dense<0.000000e+00> : vector<8x128xf32>
    %192 = tpu.matmul %160, %0, %cst_48 {dimension_numbers = #tpu.dot_dimension_numbers<[1], [0], [0], [1], [0, 0, 1, 1], [], []>} : vector<8x32xf32>, vector<32x128xf32>, vector<8x128xf32> -> vector<8x128xf32>
    %193 = arith.addf %191, %192 : vector<8x128xf32>
    %194 = vector.extract_strided_slice %193 {offsets = [0, 0], sizes = [8, 32], strides = [1, 1]} : vector<8x128xf32> to vector<8x32xf32>
    %195 = arith.negf %194 : vector<8x32xf32>
    %196 = math.exp %195 : vector<8x32xf32>
    %cst_49 = arith.constant 1.000000e+00 : f32
    %197 = vector.broadcast %cst_49 : f32 to vector<8x32xf32>
    %198 = arith.addf %197, %196 : vector<8x32xf32>
    %199 = arith.divf %197, %198 : vector<8x32xf32>
    %200 = vector.extract_strided_slice %193 {offsets = [0, 32], sizes = [8, 32], strides = [1, 1]} : vector<8x128xf32> to vector<8x32xf32>
    %201 = arith.negf %200 : vector<8x32xf32>
    %202 = math.exp %201 : vector<8x32xf32>
    %cst_50 = arith.constant 1.000000e+00 : f32
    %203 = vector.broadcast %cst_50 : f32 to vector<8x32xf32>
    %204 = arith.addf %203, %202 : vector<8x32xf32>
    %205 = arith.divf %203, %204 : vector<8x32xf32>
    %206 = vector.extract_strided_slice %193 {offsets = [0, 64], sizes = [8, 32], strides = [1, 1]} : vector<8x128xf32> to vector<8x32xf32>
    %207 = math.tanh %206 : vector<8x32xf32>
    %208 = vector.extract_strided_slice %193 {offsets = [0, 96], sizes = [8, 32], strides = [1, 1]} : vector<8x128xf32> to vector<8x32xf32>
    %209 = arith.negf %208 : vector<8x32xf32>
    %210 = math.exp %209 : vector<8x32xf32>
    %cst_51 = arith.constant 1.000000e+00 : f32
    %211 = vector.broadcast %cst_51 : f32 to vector<8x32xf32>
    %212 = arith.addf %211, %210 : vector<8x32xf32>
    %213 = arith.divf %211, %212 : vector<8x32xf32>
    %214 = arith.mulf %205, %158 : vector<8x32xf32>
    %215 = arith.mulf %199, %207 : vector<8x32xf32>
    %216 = arith.addf %214, %215 : vector<8x32xf32>
    %217 = math.tanh %216 : vector<8x32xf32>
    %218 = arith.mulf %213, %217 : vector<8x32xf32>
    %219 = tpu.concatenate %218, %188 in 1 : vector<8x32xf32>, vector<8x32xf32> -> vector<8x64xf32>
    %cst_52 = arith.constant dense<0.000000e+00> : vector<8x128xf32>
    %220 = tpu.matmul %219, %1, %cst_52 {dimension_numbers = #tpu.dot_dimension_numbers<[1], [0], [0], [1], [0, 0, 1, 1], [], []>} : vector<8x64xf32>, vector<64x128xf32>, vector<8x128xf32> -> vector<8x128xf32>
    %221 = arith.addf %220, %13 : vector<8x128xf32>
    %222 = vector.extract_strided_slice %221 {offsets = [0, 0], sizes = [8, 32], strides = [1, 1]} : vector<8x128xf32> to vector<8x32xf32>
    %223 = arith.negf %222 : vector<8x32xf32>
    %224 = math.exp %223 : vector<8x32xf32>
    %cst_53 = arith.constant 1.000000e+00 : f32
    %225 = vector.broadcast %cst_53 : f32 to vector<8x32xf32>
    %226 = arith.addf %225, %224 : vector<8x32xf32>
    %227 = arith.divf %225, %226 : vector<8x32xf32>
    %228 = vector.extract_strided_slice %221 {offsets = [0, 32], sizes = [8, 32], strides = [1, 1]} : vector<8x128xf32> to vector<8x32xf32>
    %229 = arith.negf %228 : vector<8x32xf32>
    %230 = math.exp %229 : vector<8x32xf32>
    %cst_54 = arith.constant 1.000000e+00 : f32
    %231 = vector.broadcast %cst_54 : f32 to vector<8x32xf32>
    %232 = arith.addf %231, %230 : vector<8x32xf32>
    %233 = arith.divf %231, %232 : vector<8x32xf32>
    %234 = vector.extract_strided_slice %221 {offsets = [0, 64], sizes = [8, 32], strides = [1, 1]} : vector<8x128xf32> to vector<8x32xf32>
    %235 = math.tanh %234 : vector<8x32xf32>
    %236 = vector.extract_strided_slice %221 {offsets = [0, 96], sizes = [8, 32], strides = [1, 1]} : vector<8x128xf32> to vector<8x32xf32>
    %237 = arith.negf %236 : vector<8x32xf32>
    %238 = math.exp %237 : vector<8x32xf32>
    %cst_55 = arith.constant 1.000000e+00 : f32
    %239 = vector.broadcast %cst_55 : f32 to vector<8x32xf32>
    %240 = arith.addf %239, %238 : vector<8x32xf32>
    %241 = arith.divf %239, %240 : vector<8x32xf32>
    %242 = arith.mulf %233, %186 : vector<8x32xf32>
    %243 = arith.mulf %227, %235 : vector<8x32xf32>
    %244 = arith.addf %242, %243 : vector<8x32xf32>
    %245 = math.tanh %244 : vector<8x32xf32>
    %246 = arith.mulf %241, %245 : vector<8x32xf32>
    %c4_i32 = arith.constant 4 : i32
    %247 = arith.index_cast %c4_i32 : i32 to index
    %c0_56 = arith.constant 0 : index
    %c0_57 = arith.constant 0 : index
    %248 = vector.load %arg9[%247, %c0_56, %c0_57] : memref<8x8x128xf32, #tpu.memory_space<vmem>>, vector<1x8x128xf32>
    %249 = vector.shape_cast %248 : vector<1x8x128xf32> to vector<8x128xf32>
    %cst_58 = arith.constant dense<0.000000e+00> : vector<8x128xf32>
    %250 = tpu.matmul %218, %0, %cst_58 {dimension_numbers = #tpu.dot_dimension_numbers<[1], [0], [0], [1], [0, 0, 1, 1], [], []>} : vector<8x32xf32>, vector<32x128xf32>, vector<8x128xf32> -> vector<8x128xf32>
    %251 = arith.addf %249, %250 : vector<8x128xf32>
    %252 = vector.extract_strided_slice %251 {offsets = [0, 0], sizes = [8, 32], strides = [1, 1]} : vector<8x128xf32> to vector<8x32xf32>
    %253 = arith.negf %252 : vector<8x32xf32>
    %254 = math.exp %253 : vector<8x32xf32>
    %cst_59 = arith.constant 1.000000e+00 : f32
    %255 = vector.broadcast %cst_59 : f32 to vector<8x32xf32>
    %256 = arith.addf %255, %254 : vector<8x32xf32>
    %257 = arith.divf %255, %256 : vector<8x32xf32>
    %258 = vector.extract_strided_slice %251 {offsets = [0, 32], sizes = [8, 32], strides = [1, 1]} : vector<8x128xf32> to vector<8x32xf32>
    %259 = arith.negf %258 : vector<8x32xf32>
    %260 = math.exp %259 : vector<8x32xf32>
    %cst_60 = arith.constant 1.000000e+00 : f32
    %261 = vector.broadcast %cst_60 : f32 to vector<8x32xf32>
    %262 = arith.addf %261, %260 : vector<8x32xf32>
    %263 = arith.divf %261, %262 : vector<8x32xf32>
    %264 = vector.extract_strided_slice %251 {offsets = [0, 64], sizes = [8, 32], strides = [1, 1]} : vector<8x128xf32> to vector<8x32xf32>
    %265 = math.tanh %264 : vector<8x32xf32>
    %266 = vector.extract_strided_slice %251 {offsets = [0, 96], sizes = [8, 32], strides = [1, 1]} : vector<8x128xf32> to vector<8x32xf32>
    %267 = arith.negf %266 : vector<8x32xf32>
    %268 = math.exp %267 : vector<8x32xf32>
    %cst_61 = arith.constant 1.000000e+00 : f32
    %269 = vector.broadcast %cst_61 : f32 to vector<8x32xf32>
    %270 = arith.addf %269, %268 : vector<8x32xf32>
    %271 = arith.divf %269, %270 : vector<8x32xf32>
    %272 = arith.mulf %263, %216 : vector<8x32xf32>
    %273 = arith.mulf %257, %265 : vector<8x32xf32>
    %274 = arith.addf %272, %273 : vector<8x32xf32>
    %275 = math.tanh %274 : vector<8x32xf32>
    %276 = arith.mulf %271, %275 : vector<8x32xf32>
    %277 = tpu.concatenate %276, %246 in 1 : vector<8x32xf32>, vector<8x32xf32> -> vector<8x64xf32>
    %cst_62 = arith.constant dense<0.000000e+00> : vector<8x128xf32>
    %278 = tpu.matmul %277, %1, %cst_62 {dimension_numbers = #tpu.dot_dimension_numbers<[1], [0], [0], [1], [0, 0, 1, 1], [], []>} : vector<8x64xf32>, vector<64x128xf32>, vector<8x128xf32> -> vector<8x128xf32>
    %279 = arith.addf %278, %13 : vector<8x128xf32>
    %280 = vector.extract_strided_slice %279 {offsets = [0, 0], sizes = [8, 32], strides = [1, 1]} : vector<8x128xf32> to vector<8x32xf32>
    %281 = arith.negf %280 : vector<8x32xf32>
    %282 = math.exp %281 : vector<8x32xf32>
    %cst_63 = arith.constant 1.000000e+00 : f32
    %283 = vector.broadcast %cst_63 : f32 to vector<8x32xf32>
    %284 = arith.addf %283, %282 : vector<8x32xf32>
    %285 = arith.divf %283, %284 : vector<8x32xf32>
    %286 = vector.extract_strided_slice %279 {offsets = [0, 32], sizes = [8, 32], strides = [1, 1]} : vector<8x128xf32> to vector<8x32xf32>
    %287 = arith.negf %286 : vector<8x32xf32>
    %288 = math.exp %287 : vector<8x32xf32>
    %cst_64 = arith.constant 1.000000e+00 : f32
    %289 = vector.broadcast %cst_64 : f32 to vector<8x32xf32>
    %290 = arith.addf %289, %288 : vector<8x32xf32>
    %291 = arith.divf %289, %290 : vector<8x32xf32>
    %292 = vector.extract_strided_slice %279 {offsets = [0, 64], sizes = [8, 32], strides = [1, 1]} : vector<8x128xf32> to vector<8x32xf32>
    %293 = math.tanh %292 : vector<8x32xf32>
    %294 = vector.extract_strided_slice %279 {offsets = [0, 96], sizes = [8, 32], strides = [1, 1]} : vector<8x128xf32> to vector<8x32xf32>
    %295 = arith.negf %294 : vector<8x32xf32>
    %296 = math.exp %295 : vector<8x32xf32>
    %cst_65 = arith.constant 1.000000e+00 : f32
    %297 = vector.broadcast %cst_65 : f32 to vector<8x32xf32>
    %298 = arith.addf %297, %296 : vector<8x32xf32>
    %299 = arith.divf %297, %298 : vector<8x32xf32>
    %300 = arith.mulf %291, %244 : vector<8x32xf32>
    %301 = arith.mulf %285, %293 : vector<8x32xf32>
    %302 = arith.addf %300, %301 : vector<8x32xf32>
    %303 = math.tanh %302 : vector<8x32xf32>
    %304 = arith.mulf %299, %303 : vector<8x32xf32>
    %c5_i32 = arith.constant 5 : i32
    %305 = arith.index_cast %c5_i32 : i32 to index
    %c0_66 = arith.constant 0 : index
    %c0_67 = arith.constant 0 : index
    %306 = vector.load %arg9[%305, %c0_66, %c0_67] : memref<8x8x128xf32, #tpu.memory_space<vmem>>, vector<1x8x128xf32>
    %307 = vector.shape_cast %306 : vector<1x8x128xf32> to vector<8x128xf32>
    %cst_68 = arith.constant dense<0.000000e+00> : vector<8x128xf32>
    %308 = tpu.matmul %276, %0, %cst_68 {dimension_numbers = #tpu.dot_dimension_numbers<[1], [0], [0], [1], [0, 0, 1, 1], [], []>} : vector<8x32xf32>, vector<32x128xf32>, vector<8x128xf32> -> vector<8x128xf32>
    %309 = arith.addf %307, %308 : vector<8x128xf32>
    %310 = vector.extract_strided_slice %309 {offsets = [0, 0], sizes = [8, 32], strides = [1, 1]} : vector<8x128xf32> to vector<8x32xf32>
    %311 = arith.negf %310 : vector<8x32xf32>
    %312 = math.exp %311 : vector<8x32xf32>
    %cst_69 = arith.constant 1.000000e+00 : f32
    %313 = vector.broadcast %cst_69 : f32 to vector<8x32xf32>
    %314 = arith.addf %313, %312 : vector<8x32xf32>
    %315 = arith.divf %313, %314 : vector<8x32xf32>
    %316 = vector.extract_strided_slice %309 {offsets = [0, 32], sizes = [8, 32], strides = [1, 1]} : vector<8x128xf32> to vector<8x32xf32>
    %317 = arith.negf %316 : vector<8x32xf32>
    %318 = math.exp %317 : vector<8x32xf32>
    %cst_70 = arith.constant 1.000000e+00 : f32
    %319 = vector.broadcast %cst_70 : f32 to vector<8x32xf32>
    %320 = arith.addf %319, %318 : vector<8x32xf32>
    %321 = arith.divf %319, %320 : vector<8x32xf32>
    %322 = vector.extract_strided_slice %309 {offsets = [0, 64], sizes = [8, 32], strides = [1, 1]} : vector<8x128xf32> to vector<8x32xf32>
    %323 = math.tanh %322 : vector<8x32xf32>
    %324 = vector.extract_strided_slice %309 {offsets = [0, 96], sizes = [8, 32], strides = [1, 1]} : vector<8x128xf32> to vector<8x32xf32>
    %325 = arith.negf %324 : vector<8x32xf32>
    %326 = math.exp %325 : vector<8x32xf32>
    %cst_71 = arith.constant 1.000000e+00 : f32
    %327 = vector.broadcast %cst_71 : f32 to vector<8x32xf32>
    %328 = arith.addf %327, %326 : vector<8x32xf32>
    %329 = arith.divf %327, %328 : vector<8x32xf32>
    %330 = arith.mulf %321, %274 : vector<8x32xf32>
    %331 = arith.mulf %315, %323 : vector<8x32xf32>
    %332 = arith.addf %330, %331 : vector<8x32xf32>
    %333 = math.tanh %332 : vector<8x32xf32>
    %334 = arith.mulf %329, %333 : vector<8x32xf32>
    %335 = tpu.concatenate %334, %304 in 1 : vector<8x32xf32>, vector<8x32xf32> -> vector<8x64xf32>
    %cst_72 = arith.constant dense<0.000000e+00> : vector<8x128xf32>
    %336 = tpu.matmul %335, %1, %cst_72 {dimension_numbers = #tpu.dot_dimension_numbers<[1], [0], [0], [1], [0, 0, 1, 1], [], []>} : vector<8x64xf32>, vector<64x128xf32>, vector<8x128xf32> -> vector<8x128xf32>
    %337 = arith.addf %336, %13 : vector<8x128xf32>
    %338 = vector.extract_strided_slice %337 {offsets = [0, 0], sizes = [8, 32], strides = [1, 1]} : vector<8x128xf32> to vector<8x32xf32>
    %339 = arith.negf %338 : vector<8x32xf32>
    %340 = math.exp %339 : vector<8x32xf32>
    %cst_73 = arith.constant 1.000000e+00 : f32
    %341 = vector.broadcast %cst_73 : f32 to vector<8x32xf32>
    %342 = arith.addf %341, %340 : vector<8x32xf32>
    %343 = arith.divf %341, %342 : vector<8x32xf32>
    %344 = vector.extract_strided_slice %337 {offsets = [0, 32], sizes = [8, 32], strides = [1, 1]} : vector<8x128xf32> to vector<8x32xf32>
    %345 = arith.negf %344 : vector<8x32xf32>
    %346 = math.exp %345 : vector<8x32xf32>
    %cst_74 = arith.constant 1.000000e+00 : f32
    %347 = vector.broadcast %cst_74 : f32 to vector<8x32xf32>
    %348 = arith.addf %347, %346 : vector<8x32xf32>
    %349 = arith.divf %347, %348 : vector<8x32xf32>
    %350 = vector.extract_strided_slice %337 {offsets = [0, 64], sizes = [8, 32], strides = [1, 1]} : vector<8x128xf32> to vector<8x32xf32>
    %351 = math.tanh %350 : vector<8x32xf32>
    %352 = vector.extract_strided_slice %337 {offsets = [0, 96], sizes = [8, 32], strides = [1, 1]} : vector<8x128xf32> to vector<8x32xf32>
    %353 = arith.negf %352 : vector<8x32xf32>
    %354 = math.exp %353 : vector<8x32xf32>
    %cst_75 = arith.constant 1.000000e+00 : f32
    %355 = vector.broadcast %cst_75 : f32 to vector<8x32xf32>
    %356 = arith.addf %355, %354 : vector<8x32xf32>
    %357 = arith.divf %355, %356 : vector<8x32xf32>
    %358 = arith.mulf %349, %302 : vector<8x32xf32>
    %359 = arith.mulf %343, %351 : vector<8x32xf32>
    %360 = arith.addf %358, %359 : vector<8x32xf32>
    %361 = math.tanh %360 : vector<8x32xf32>
    %362 = arith.mulf %357, %361 : vector<8x32xf32>
    %c6_i32 = arith.constant 6 : i32
    %363 = arith.index_cast %c6_i32 : i32 to index
    %c0_76 = arith.constant 0 : index
    %c0_77 = arith.constant 0 : index
    %364 = vector.load %arg9[%363, %c0_76, %c0_77] : memref<8x8x128xf32, #tpu.memory_space<vmem>>, vector<1x8x128xf32>
    %365 = vector.shape_cast %364 : vector<1x8x128xf32> to vector<8x128xf32>
    %cst_78 = arith.constant dense<0.000000e+00> : vector<8x128xf32>
    %366 = tpu.matmul %334, %0, %cst_78 {dimension_numbers = #tpu.dot_dimension_numbers<[1], [0], [0], [1], [0, 0, 1, 1], [], []>} : vector<8x32xf32>, vector<32x128xf32>, vector<8x128xf32> -> vector<8x128xf32>
    %367 = arith.addf %365, %366 : vector<8x128xf32>
    %368 = vector.extract_strided_slice %367 {offsets = [0, 0], sizes = [8, 32], strides = [1, 1]} : vector<8x128xf32> to vector<8x32xf32>
    %369 = arith.negf %368 : vector<8x32xf32>
    %370 = math.exp %369 : vector<8x32xf32>
    %cst_79 = arith.constant 1.000000e+00 : f32
    %371 = vector.broadcast %cst_79 : f32 to vector<8x32xf32>
    %372 = arith.addf %371, %370 : vector<8x32xf32>
    %373 = arith.divf %371, %372 : vector<8x32xf32>
    %374 = vector.extract_strided_slice %367 {offsets = [0, 32], sizes = [8, 32], strides = [1, 1]} : vector<8x128xf32> to vector<8x32xf32>
    %375 = arith.negf %374 : vector<8x32xf32>
    %376 = math.exp %375 : vector<8x32xf32>
    %cst_80 = arith.constant 1.000000e+00 : f32
    %377 = vector.broadcast %cst_80 : f32 to vector<8x32xf32>
    %378 = arith.addf %377, %376 : vector<8x32xf32>
    %379 = arith.divf %377, %378 : vector<8x32xf32>
    %380 = vector.extract_strided_slice %367 {offsets = [0, 64], sizes = [8, 32], strides = [1, 1]} : vector<8x128xf32> to vector<8x32xf32>
    %381 = math.tanh %380 : vector<8x32xf32>
    %382 = vector.extract_strided_slice %367 {offsets = [0, 96], sizes = [8, 32], strides = [1, 1]} : vector<8x128xf32> to vector<8x32xf32>
    %383 = arith.negf %382 : vector<8x32xf32>
    %384 = math.exp %383 : vector<8x32xf32>
    %cst_81 = arith.constant 1.000000e+00 : f32
    %385 = vector.broadcast %cst_81 : f32 to vector<8x32xf32>
    %386 = arith.addf %385, %384 : vector<8x32xf32>
    %387 = arith.divf %385, %386 : vector<8x32xf32>
    %388 = arith.mulf %379, %332 : vector<8x32xf32>
    %389 = arith.mulf %373, %381 : vector<8x32xf32>
    %390 = arith.addf %388, %389 : vector<8x32xf32>
    %391 = math.tanh %390 : vector<8x32xf32>
    %392 = arith.mulf %387, %391 : vector<8x32xf32>
    %393 = tpu.concatenate %392, %362 in 1 : vector<8x32xf32>, vector<8x32xf32> -> vector<8x64xf32>
    %cst_82 = arith.constant dense<0.000000e+00> : vector<8x128xf32>
    %394 = tpu.matmul %393, %1, %cst_82 {dimension_numbers = #tpu.dot_dimension_numbers<[1], [0], [0], [1], [0, 0, 1, 1], [], []>} : vector<8x64xf32>, vector<64x128xf32>, vector<8x128xf32> -> vector<8x128xf32>
    %395 = arith.addf %394, %13 : vector<8x128xf32>
    %396 = vector.extract_strided_slice %395 {offsets = [0, 0], sizes = [8, 32], strides = [1, 1]} : vector<8x128xf32> to vector<8x32xf32>
    %397 = arith.negf %396 : vector<8x32xf32>
    %398 = math.exp %397 : vector<8x32xf32>
    %cst_83 = arith.constant 1.000000e+00 : f32
    %399 = vector.broadcast %cst_83 : f32 to vector<8x32xf32>
    %400 = arith.addf %399, %398 : vector<8x32xf32>
    %401 = arith.divf %399, %400 : vector<8x32xf32>
    %402 = vector.extract_strided_slice %395 {offsets = [0, 32], sizes = [8, 32], strides = [1, 1]} : vector<8x128xf32> to vector<8x32xf32>
    %403 = arith.negf %402 : vector<8x32xf32>
    %404 = math.exp %403 : vector<8x32xf32>
    %cst_84 = arith.constant 1.000000e+00 : f32
    %405 = vector.broadcast %cst_84 : f32 to vector<8x32xf32>
    %406 = arith.addf %405, %404 : vector<8x32xf32>
    %407 = arith.divf %405, %406 : vector<8x32xf32>
    %408 = vector.extract_strided_slice %395 {offsets = [0, 64], sizes = [8, 32], strides = [1, 1]} : vector<8x128xf32> to vector<8x32xf32>
    %409 = math.tanh %408 : vector<8x32xf32>
    %410 = vector.extract_strided_slice %395 {offsets = [0, 96], sizes = [8, 32], strides = [1, 1]} : vector<8x128xf32> to vector<8x32xf32>
    %411 = arith.negf %410 : vector<8x32xf32>
    %412 = math.exp %411 : vector<8x32xf32>
    %cst_85 = arith.constant 1.000000e+00 : f32
    %413 = vector.broadcast %cst_85 : f32 to vector<8x32xf32>
    %414 = arith.addf %413, %412 : vector<8x32xf32>
    %415 = arith.divf %413, %414 : vector<8x32xf32>
    %416 = arith.mulf %407, %360 : vector<8x32xf32>
    %417 = arith.mulf %401, %409 : vector<8x32xf32>
    %418 = arith.addf %416, %417 : vector<8x32xf32>
    %419 = math.tanh %418 : vector<8x32xf32>
    %420 = arith.mulf %415, %419 : vector<8x32xf32>
    %c7_i32 = arith.constant 7 : i32
    %421 = arith.index_cast %c7_i32 : i32 to index
    %c0_86 = arith.constant 0 : index
    %c0_87 = arith.constant 0 : index
    %422 = vector.load %arg9[%421, %c0_86, %c0_87] : memref<8x8x128xf32, #tpu.memory_space<vmem>>, vector<1x8x128xf32>
    %423 = vector.shape_cast %422 : vector<1x8x128xf32> to vector<8x128xf32>
    %cst_88 = arith.constant dense<0.000000e+00> : vector<8x128xf32>
    %424 = tpu.matmul %392, %0, %cst_88 {dimension_numbers = #tpu.dot_dimension_numbers<[1], [0], [0], [1], [0, 0, 1, 1], [], []>} : vector<8x32xf32>, vector<32x128xf32>, vector<8x128xf32> -> vector<8x128xf32>
    %425 = arith.addf %423, %424 : vector<8x128xf32>
    %426 = vector.extract_strided_slice %425 {offsets = [0, 0], sizes = [8, 32], strides = [1, 1]} : vector<8x128xf32> to vector<8x32xf32>
    %427 = arith.negf %426 : vector<8x32xf32>
    %428 = math.exp %427 : vector<8x32xf32>
    %cst_89 = arith.constant 1.000000e+00 : f32
    %429 = vector.broadcast %cst_89 : f32 to vector<8x32xf32>
    %430 = arith.addf %429, %428 : vector<8x32xf32>
    %431 = arith.divf %429, %430 : vector<8x32xf32>
    %432 = vector.extract_strided_slice %425 {offsets = [0, 32], sizes = [8, 32], strides = [1, 1]} : vector<8x128xf32> to vector<8x32xf32>
    %433 = arith.negf %432 : vector<8x32xf32>
    %434 = math.exp %433 : vector<8x32xf32>
    %cst_90 = arith.constant 1.000000e+00 : f32
    %435 = vector.broadcast %cst_90 : f32 to vector<8x32xf32>
    %436 = arith.addf %435, %434 : vector<8x32xf32>
    %437 = arith.divf %435, %436 : vector<8x32xf32>
    %438 = vector.extract_strided_slice %425 {offsets = [0, 64], sizes = [8, 32], strides = [1, 1]} : vector<8x128xf32> to vector<8x32xf32>
    %439 = math.tanh %438 : vector<8x32xf32>
    %440 = vector.extract_strided_slice %425 {offsets = [0, 96], sizes = [8, 32], strides = [1, 1]} : vector<8x128xf32> to vector<8x32xf32>
    %441 = arith.negf %440 : vector<8x32xf32>
    %442 = math.exp %441 : vector<8x32xf32>
    %cst_91 = arith.constant 1.000000e+00 : f32
    %443 = vector.broadcast %cst_91 : f32 to vector<8x32xf32>
    %444 = arith.addf %443, %442 : vector<8x32xf32>
    %445 = arith.divf %443, %444 : vector<8x32xf32>
    %446 = arith.mulf %437, %390 : vector<8x32xf32>
    %447 = arith.mulf %431, %439 : vector<8x32xf32>
    %448 = arith.addf %446, %447 : vector<8x32xf32>
    %449 = math.tanh %448 : vector<8x32xf32>
    %450 = arith.mulf %445, %449 : vector<8x32xf32>
    %451 = tpu.concatenate %450, %420 in 1 : vector<8x32xf32>, vector<8x32xf32> -> vector<8x64xf32>
    %cst_92 = arith.constant dense<0.000000e+00> : vector<8x128xf32>
    %452 = tpu.matmul %451, %1, %cst_92 {dimension_numbers = #tpu.dot_dimension_numbers<[1], [0], [0], [1], [0, 0, 1, 1], [], []>} : vector<8x64xf32>, vector<64x128xf32>, vector<8x128xf32> -> vector<8x128xf32>
    %453 = arith.addf %452, %13 : vector<8x128xf32>
    %454 = vector.extract_strided_slice %453 {offsets = [0, 0], sizes = [8, 32], strides = [1, 1]} : vector<8x128xf32> to vector<8x32xf32>
    %455 = arith.negf %454 : vector<8x32xf32>
    %456 = math.exp %455 : vector<8x32xf32>
    %cst_93 = arith.constant 1.000000e+00 : f32
    %457 = vector.broadcast %cst_93 : f32 to vector<8x32xf32>
    %458 = arith.addf %457, %456 : vector<8x32xf32>
    %459 = arith.divf %457, %458 : vector<8x32xf32>
    %460 = vector.extract_strided_slice %453 {offsets = [0, 32], sizes = [8, 32], strides = [1, 1]} : vector<8x128xf32> to vector<8x32xf32>
    %461 = arith.negf %460 : vector<8x32xf32>
    %462 = math.exp %461 : vector<8x32xf32>
    %cst_94 = arith.constant 1.000000e+00 : f32
    %463 = vector.broadcast %cst_94 : f32 to vector<8x32xf32>
    %464 = arith.addf %463, %462 : vector<8x32xf32>
    %465 = arith.divf %463, %464 : vector<8x32xf32>
    %466 = vector.extract_strided_slice %453 {offsets = [0, 64], sizes = [8, 32], strides = [1, 1]} : vector<8x128xf32> to vector<8x32xf32>
    %467 = math.tanh %466 : vector<8x32xf32>
    %468 = vector.extract_strided_slice %453 {offsets = [0, 96], sizes = [8, 32], strides = [1, 1]} : vector<8x128xf32> to vector<8x32xf32>
    %469 = arith.negf %468 : vector<8x32xf32>
    %470 = math.exp %469 : vector<8x32xf32>
    %cst_95 = arith.constant 1.000000e+00 : f32
    %471 = vector.broadcast %cst_95 : f32 to vector<8x32xf32>
    %472 = arith.addf %471, %470 : vector<8x32xf32>
    %473 = arith.divf %471, %472 : vector<8x32xf32>
    %474 = arith.mulf %465, %418 : vector<8x32xf32>
    %475 = arith.mulf %459, %467 : vector<8x32xf32>
    %476 = arith.addf %474, %475 : vector<8x32xf32>
    %477 = math.tanh %476 : vector<8x32xf32>
    %478 = arith.mulf %473, %477 : vector<8x32xf32>
    %c8_i32 = arith.constant 8 : i32
    %c0_96 = arith.constant 0 : index
    %c0_97 = arith.constant 0 : index
    %479 = vector.load %arg6[%c0_96, %c0_97] : memref<32x1xf32, #tpu.memory_space<vmem>>, vector<32x1xf32>
    %cst_98 = arith.constant dense<0.000000e+00> : vector<8x1xf32>
    %480 = tpu.matmul %478, %479, %cst_98 {dimension_numbers = #tpu.dot_dimension_numbers<[1], [0], [0], [1], [0, 0, 1, 1], [], []>} : vector<8x32xf32>, vector<32x1xf32>, vector<8x1xf32> -> vector<8x1xf32>
    %c0_99 = arith.constant 0 : index
    %c0_100 = arith.constant 0 : index
    %481 = vector.load %arg7[%c0_99, %c0_100] : memref<1x1xf32, #tpu.memory_space<vmem>>, vector<1x1xf32>
    %482 = vector.broadcast %481 : vector<1x1xf32> to vector<8x1xf32>
    %483 = arith.addf %480, %482 : vector<8x1xf32>
    %c0_101 = arith.constant 0 : index
    %c0_102 = arith.constant 0 : index
    %484 = vector.load %arg8[%c0_101, %c0_102] : memref<8x1xf32, #tpu.memory_space<vmem>>, vector<8x1xf32>
    tpu.vector_store %arg8[%c0_101, %c0_102], %483 {strides = array<i32>} : memref<8x1xf32, #tpu.memory_space<vmem>>, vector<8x1xf32>,
    return
  }
}

</mosaic_0001>

<llo_original>
// kernel: lstm_model_forward.1
$region0: #{lstm_model_forward.1}
  #allocation0 [shape = 'u32[]', space=smem, size = 0x4, offset = 0x4, fixed_abs, tag = 'smem constant byte address 0x4 - core index']
  #allocation1 [shape = 'u32[144,128]{1,0:T(1,128)}', space=vmem, size = 0x12000, scoped, tag = 'internal scratch']
  #allocation2 [shape = 'f32[8,8,128]{2,1,0:T(8,128)}', space=vmem, size = 0x8000, scoped, tag = 'scratch operand']
  #allocation3 [shape = 'f32[1,1]{1,0:T(1,128)S(1)}', space=vmem, size = 0x200, scoped, tag = 'scoped memory for lstm_model_forward.1']
  %s0 = inlined_call_operand.vmem [shape: f32[8,8,8], index: 0, kind: input, shape index: {}]
  %s1 = inlined_call_operand.vmem [shape: f32[8,128], index: 1, kind: input, shape index: {}]
  %s2 = inlined_call_operand.vmem [shape: f32[32,128], index: 2, kind: input, shape index: {}]
  %s3 = inlined_call_operand.vmem [shape: f32[1,128], index: 3, kind: input, shape index: {}]
  %s4 = inlined_call_operand.vmem [shape: f32[64,128], index: 4, kind: input, shape index: {}]
  %s5 = inlined_call_operand.vmem [shape: f32[1,128], index: 5, kind: input, shape index: {}]
  %s6 = inlined_call_operand.vmem [shape: f32[32,1], index: 6, kind: input, shape index: {}]
  %s7 = inlined_call_operand.<no memory space> [shape: f32[1,1], index: 7, kind: input, shape index: {}]
  %s8 = inlined_call_operand.vmem [shape: f32[8,1], index: 8, kind: output, shape index: {}]
  %s9 = sld [smem:[#allocation0]]
  $region42: #{lstm_model_forward.1} parent=0
    _
  %s11 = ssub.s32 1, %s9
  %s12 = scalar_select 0, %s11, %s9
  %v13 = vstv %s7
  %14 = vst [vmem:[#allocation3] sm:$0x1] %v13
  // Predicated region
  $region2: #{lstm_model_forward.1} parent=0 // pred_check
    _
  $region3: #{lstm_model_forward.1} parent=0 // pred_check_branch
    %16 = sbr.rel (0) target = $region5
  $region4: #{lstm_model_forward.1} parent=0 // pred_region
    _
  $region5: #{lstm_model_forward.1} parent=0 // pred_fallthru
    _
  // Predicated region
  $region6: #{lstm_model_forward.1} parent=0 // pred_check
    _
  $region7: #{lstm_model_forward.1} parent=0 // pred_check_branch
    %18 = sbr.rel (0) target = $region9
  $region8: #{lstm_model_forward.1} parent=0 // pred_region
    _
  $region9: #{lstm_model_forward.1} parent=0 // pred_fallthru
    _
  // Predicated region
  $region10: #{lstm_model_forward.1} parent=0 // pred_check
    _
  $region11: #{lstm_model_forward.1} parent=0 // pred_check_branch
    %20 = sbr.rel (0) target = $region13
  $region12: #{lstm_model_forward.1} parent=0 // pred_region
    _
  $region13: #{lstm_model_forward.1} parent=0 // pred_fallthru
    _
  // Predicated region
  $region14: #{lstm_model_forward.1} parent=0 // pred_check
    _
  $region15: #{lstm_model_forward.1} parent=0 // pred_check_branch
    %22 = sbr.rel (0) target = $region17
  $region16: #{lstm_model_forward.1} parent=0 // pred_region
    _
  $region17: #{lstm_model_forward.1} parent=0 // pred_fallthru
    _
  // Predicated region
  $region18: #{lstm_model_forward.1} parent=0 // pred_check
    _
  $region19: #{lstm_model_forward.1} parent=0 // pred_check_branch
    %24 = sbr.rel (0) target = $region21
  $region20: #{lstm_model_forward.1} parent=0 // pred_region
    _
  $region21: #{lstm_model_forward.1} parent=0 // pred_fallthru
    _
  // Predicated region
  $region22: #{lstm_model_forward.1} parent=0 // pred_check
    _
  $region23: #{lstm_model_forward.1} parent=0 // pred_check_branch
    %26 = sbr.rel (0) target = $region25
  $region24: #{lstm_model_forward.1} parent=0 // pred_region
    _
  $region25: #{lstm_model_forward.1} parent=0 // pred_fallthru
    _
  // Predicated region
  $region26: #{lstm_model_forward.1} parent=0 // pred_check
    _
  $region27: #{lstm_model_forward.1} parent=0 // pred_check_branch
    %28 = sbr.rel (0) target = $region29
  $region28: #{lstm_model_forward.1} parent=0 // pred_region
    _
  $region29: #{lstm_model_forward.1} parent=0 // pred_fallthru
    _
  // Predicated region
  $region30: #{lstm_model_forward.1} parent=0 // pred_check
    _
  $region31: #{lstm_model_forward.1} parent=0 // pred_check_branch
    %30 = sbr.rel (0) target = $region33
  $region32: #{lstm_model_forward.1} parent=0 // pred_region
    _
  $region33: #{lstm_model_forward.1} parent=0 // pred_fallthru
    _
  %v31 = vld [vmem:[%s2] sm:$0xff]
  %v32 = vld [vmem:[%s2 + $0x8] sm:$0xff]
  %v33 = vld [vmem:[%s2 + $0x10] sm:$0xff]
  %v34 = vld [vmem:[%s2 + $0x18] sm:$0xff]
  %v35 = vld [vmem:[%s4] sm:$0xff]
  %v36 = vld [vmem:[%s4 + $0x8] sm:$0xff]
  %v37 = vld [vmem:[%s4 + $0x10] sm:$0xff]
  %v38 = vld [vmem:[%s4 + $0x18] sm:$0xff]
  %v39 = vld [vmem:[%s4 + $0x20] sm:$0xff]
  %v40 = vld [vmem:[%s4 + $0x28] sm:$0xff]
  %v41 = vld [vmem:[%s4 + $0x30] sm:$0xff]
  %v42 = vld [vmem:[%s4 + $0x38] sm:$0xff]
  %v43 = vld [vmem:[%s0] sm:$0xff]
  %v44 = vld [vmem:[%s0 + $0x8] sm:$0xff]
  %v45 = vld [vmem:[%s0 + $0x10] sm:$0xff]
  %v46 = vld [vmem:[%s0 + $0x18] sm:$0xff]
  %v47 = vld [vmem:[%s0 + $0x20] sm:$0xff]
  %v48 = vld [vmem:[%s0 + $0x28] sm:$0xff]
  %v49 = vld [vmem:[%s0 + $0x30] sm:$0xff]
  %v50 = vld [vmem:[%s0 + $0x38] sm:$0xff]
  %v51 = vld [vmem:[%s1] sm:$0xff]
  %v52 = vld [vmem:[%s3] sm:$0x1]
  %v54 = vlaneseq
  %v55 = vshrl.u32 %v54, 7
  %v56 = vsub.s32 0, %v55
  %v57 = vrot.slane %v52, %v56
  %vm59 = vcmask 64512
  %v61 = vsel %vm59, %v43, 0
  %v64 = vsel %vm59, %v44, 0
  %v67 = vsel %vm59, %v45, 0
  %v70 = vsel %vm59, %v46, 0
  %v73 = vsel %vm59, %v47, 0
  %v76 = vsel %vm59, %v48, 0
  %v79 = vsel %vm59, %v49, 0
  %v82 = vsel %vm59, %v50, 0
  %84 = vmatprep.subr.mxu0 0.0
  %85 = vmatpush1.msra.mxu0 %v51
  %86 = vmatprep.subr.mxu0 0.0
  %87 = vmatpush1.msra.mxu0 0.0
  %88 = vmatprep.subr.mxu0 0.0
  %89 = vmatpush1.msra.mxu0 0.0
  %90 = vmatprep.subr.mxu0 0.0
  %91 = vmatpush1.msra.mxu0 0.0
  %92 = vmatprep.subr.mxu0 0.0
  %93 = vmatpush1.msra.mxu0 0.0
  %94 = vmatprep.subr.mxu0 0.0
  %95 = vmatpush1.msra.mxu0 0.0
  %96 = vmatprep.subr.mxu0 0.0
  %97 = vmatpush1.msra.mxu0 0.0
  %98 = vmatprep.subr.mxu0 0.0
  %99 = vmatpush1.msra.mxu0 0.0
  %100 = vmatprep.subr.mxu0 0.0
  %101 = vmatpush1.msra.mxu0 0.0
  %102 = vmatprep.subr.mxu0 0.0
  %103 = vmatpush1.msra.mxu0 0.0
  %104 = vmatprep.subr.mxu0 0.0
  %105 = vmatpush1.msra.mxu0 0.0
  %106 = vmatprep.subr.mxu0 0.0
  %107 = vmatpush1.msra.mxu0 0.0
  %108 = vmatprep.subr.mxu0 0.0
  %109 = vmatpush1.msra.mxu0 0.0
  %110 = vmatprep.subr.mxu0 0.0
  %111 = vmatpush1.msra.mxu0 0.0
  %112 = vmatprep.subr.mxu0 0.0
  %113 = vmatpush1.msra.mxu0 0.0
  %114 = vmatprep.subr.mxu0 0.0
  %115 = vmatpush1.msra.mxu0 0.0
  %116 = vmatprep.subr.mxu0 0.0
  %117 = vmatpush1.msra.mxu0 0.0
  %118 = vmatprep.subr.mxu0 0.0
  %119 = vmatpush1.msra.mxu0 0.0
  %120 = vmatprep.subr.mxu0 0.0
  %121 = vmatpush1.msra.mxu0 0.0
  %122 = vmatprep.subr.mxu0 0.0
  %123 = vmatpush1.msra.mxu0 0.0
  %124 = vmatprep.subr.mxu0 0.0
  %125 = vmatpush1.msra.mxu0 0.0
  %126 = vmatprep.subr.mxu0 0.0
  %127 = vmatpush1.msra.mxu0 0.0
  %128 = vmatprep.subr.mxu0 0.0
  %129 = vmatpush1.msra.mxu0 0.0
  %130 = vmatprep.subr.mxu0 0.0
  %131 = vmatpush1.msra.mxu0 0.0
  %132 = vmatprep.subr.mxu0 0.0
  %133 = vmatpush1.msra.mxu0 0.0
  %134 = vmatprep.subr.mxu0 0.0
  %135 = vmatpush1.msra.mxu0 0.0
  %136 = vmatprep.subr.mxu0 0.0
  %137 = vmatpush1.msra.mxu0 0.0
  %138 = vmatprep.subr.mxu0 0.0
  %139 = vmatpush1.msra.mxu0 0.0
  %140 = vmatprep.subr.mxu0 0.0
  %141 = vmatpush1.msra.mxu0 0.0
  %142 = vmatprep.subr.mxu0 0.0
  %143 = vmatpush1.msra.mxu0 0.0
  %144 = vmatprep.subr.mxu0 0.0
  %145 = vmatpush1.msra.mxu0 0.0
  %146 = vmatprep.subr.mxu0 0.0
  %147 = vmatpush1.msra.mxu0 0.0
  %148 = vmatprep.mubr.f32.mxu0 0.0
  %149 = vmatmul.mubr.f32.gmra.mrb[0].mxu0 %v61
  %v150 = vpop.f32.mrb[0].mxu0
  %v151 = vadd.f32 %v57, %v150
  %v152 = vpop.f32.mrb[0].mxu0
  %153 = vmatprep.mubr.f32.mxu0 0.0
  %154 = vmatmul.mubr.f32.gmra.mrb[0].mxu0 %v64
  %v155 = vpop.f32.mrb[0].mxu0
  %v156 = vadd.f32 %v57, %v155
  %v157 = vpop.f32.mrb[0].mxu0
  %158 = vmatprep.mubr.f32.mxu0 0.0
  %159 = vmatmul.mubr.f32.gmra.mrb[0].mxu0 %v67
  %v160 = vpop.f32.mrb[0].mxu0
  %v161 = vadd.f32 %v57, %v160
  %v162 = vpop.f32.mrb[0].mxu0
  %163 = vmatprep.mubr.f32.mxu0 0.0
  %164 = vmatmul.mubr.f32.gmra.mrb[0].mxu0 %v70
  %v165 = vpop.f32.mrb[0].mxu0
  %v166 = vadd.f32 %v57, %v165
  %v167 = vpop.f32.mrb[0].mxu0
  %168 = vmatprep.mubr.f32.mxu0 0.0
  %169 = vmatmul.mubr.f32.gmra.mrb[0].mxu0 %v73
  %v170 = vpop.f32.mrb[0].mxu0
  %v171 = vadd.f32 %v57, %v170
  %v172 = vpop.f32.mrb[0].mxu0
  %173 = vmatprep.mubr.f32.mxu0 0.0
  %174 = vmatmul.mubr.f32.gmra.mrb[0].mxu0 %v76
  %v175 = vpop.f32.mrb[0].mxu0
  %v176 = vadd.f32 %v57, %v175
  %v177 = vpop.f32.mrb[0].mxu0
  %178 = vmatprep.mubr.f32.mxu0 0.0
  %179 = vmatmul.mubr.f32.gmra.mrb[0].mxu0 %v79
  %v180 = vpop.f32.mrb[0].mxu0
  %v181 = vadd.f32 %v57, %v180
  %v182 = vpop.f32.mrb[0].mxu0
  %183 = vmatprep.mubr.f32.mxu0 0.0
  %184 = vmatmul.mubr.f32.gmra.mrb[0].mxu0 %v82
  %v185 = vpop.f32.mrb[0].mxu0
  %v186 = vadd.f32 %v57, %v185
  %v187 = vpop.f32.mrb[0].mxu0
  %188 = vdwg.mxu0
  %189 = vst [vmem:[#allocation2] sm:$0xff] %v151
  %190 = vst [vmem:[#allocation2 + $0x8] sm:$0xff] %v156
  %191 = vst [vmem:[#allocation2 + $0x10] sm:$0xff] %v161
  %192 = vst [vmem:[#allocation2 + $0x18] sm:$0xff] %v166
  %193 = vst [vmem:[#allocation2 + $0x20] sm:$0xff] %v171
  %194 = vst [vmem:[#allocation2 + $0x28] sm:$0xff] %v176
  %195 = vst [vmem:[#allocation2 + $0x30] sm:$0xff] %v181
  %196 = vst [vmem:[#allocation2 + $0x38] sm:$0xff] %v186
  %v197 = vld [vmem:[%s5] sm:$0x1]
  %v199 = vlaneseq
  %v200 = vshrl.u32 %v199, 7
  %v201 = vsub.s32 0, %v200
  %v202 = vrot.slane %v197, %v201
  %v204 = vld [vmem:[#allocation2] sm:$0xff]
  %vm205 = vcmask 261120
  %v207 = vsel %vm205, 0.0, 0
  %209 = vmatprep.subr.mxu0 0.0
  %210 = vmatpush1.msra.mxu0 %v31
  %211 = vmatprep.subr.mxu0 0.0
  %212 = vmatpush1.msra.mxu0 %v32
  %213 = vmatprep.subr.mxu0 0.0
  %214 = vmatpush1.msra.mxu0 %v33
  %215 = vmatprep.subr.mxu0 0.0
  %216 = vmatpush1.msra.mxu0 %v34
  %217 = vmatprep.subr.mxu0 0.0
  %218 = vmatpush1.msra.mxu0 0.0
  %219 = vmatprep.subr.mxu0 0.0
  %220 = vmatpush1.msra.mxu0 0.0
  %221 = vmatprep.subr.mxu0 0.0
  %222 = vmatpush1.msra.mxu0 0.0
  %223 = vmatprep.subr.mxu0 0.0
  %224 = vmatpush1.msra.mxu0 0.0
  %225 = vmatprep.subr.mxu0 0.0
  %226 = vmatpush1.msra.mxu0 0.0
  %227 = vmatprep.subr.mxu0 0.0
  %228 = vmatpush1.msra.mxu0 0.0
  %229 = vmatprep.subr.mxu0 0.0
  %230 = vmatpush1.msra.mxu0 0.0
  %231 = vmatprep.subr.mxu0 0.0
  %232 = vmatpush1.msra.mxu0 0.0
  %233 = vmatprep.subr.mxu0 0.0
  %234 = vmatpush1.msra.mxu0 0.0
  %235 = vmatprep.subr.mxu0 0.0
  %236 = vmatpush1.msra.mxu0 0.0
  %237 = vmatprep.subr.mxu0 0.0
  %238 = vmatpush1.msra.mxu0 0.0
  %239 = vmatprep.subr.mxu0 0.0
  %240 = vmatpush1.msra.mxu0 0.0
  %241 = vmatprep.subr.mxu0 0.0
  %242 = vmatpush1.msra.mxu0 0.0
  %243 = vmatprep.subr.mxu0 0.0
  %244 = vmatpush1.msra.mxu0 0.0
  %245 = vmatprep.subr.mxu0 0.0
  %246 = vmatpush1.msra.mxu0 0.0
  %247 = vmatprep.subr.mxu0 0.0
  %248 = vmatpush1.msra.mxu0 0.0
  %249 = vmatprep.subr.mxu0 0.0
  %250 = vmatpush1.msra.mxu0 0.0
  %251 = vmatprep.subr.mxu0 0.0
  %252 = vmatpush1.msra.mxu0 0.0
  %253 = vmatprep.subr.mxu0 0.0
  %254 = vmatpush1.msra.mxu0 0.0
  %255 = vmatprep.subr.mxu0 0.0
  %256 = vmatpush1.msra.mxu0 0.0
  %257 = vmatprep.subr.mxu0 0.0
  %258 = vmatpush1.msra.mxu0 0.0
  %259 = vmatprep.subr.mxu0 0.0
  %260 = vmatpush1.msra.mxu0 0.0
  %261 = vmatprep.subr.mxu0 0.0
  %262 = vmatpush1.msra.mxu0 0.0
  %263 = vmatprep.subr.mxu0 0.0
  %264 = vmatpush1.msra.mxu0 0.0
  %265 = vmatprep.subr.mxu0 0.0
  %266 = vmatpush1.msra.mxu0 0.0
  %267 = vmatprep.subr.mxu0 0.0
  %268 = vmatpush1.msra.mxu0 0.0
  %269 = vmatprep.subr.mxu0 0.0
  %270 = vmatpush1.msra.mxu0 0.0
  %271 = vmatprep.subr.mxu0 0.0
  %272 = vmatpush1.msra.mxu0 0.0
  %273 = vmatprep.mubr.f32.mxu0 0.0
  %274 = vmatmul.mubr.f32.gmra.mrb[0].mxu0 %v207
  %v275 = vpop.f32.mrb[0].mxu0
  %v276 = vadd.f32 0.0, %v275
  %v277 = vpop.f32.mrb[0].mxu0
  %278 = vdwg.mxu0
  %v279 = vadd.f32 %v204, %v276
  %v280 = vxor.u32 %v279, 2147483648
  %v281 = vmul.f32 %v280, 1.442695
  %v282 = vpow.pop %v281
  %v283 = vadd.f32 %v282, 1.0
  %v284 = vrcp.pop %v283
  %v285 = vmul.f32 1.0, %v284
  %v286 = vtanh.pop %v279
  %v287 = vmul.f32 %v285, 0.0
  %289 = vrot.lane.b32.xlu0 %v286, 64
  %v290 = vpop.permute.xlu0 %289
  %v292 = vmul.f32 %v285, %v290
  %294 = vrot.lane.b32.xlu0 %v292, 32
  %v295 = vpop.permute.xlu0 %294
  %v297 = vadd.f32 %v287, %v295
  %v298 = vtanh.pop %v297
  %300 = vrot.lane.b32.xlu0 %v298, 64
  %v301 = vpop.permute.xlu0 %300
  %v303 = vmul.f32 %v285, %v301
  %305 = vrot.lane.b32.xlu0 %v303, 32
  %v306 = vpop.permute.xlu0 %305
  %v308 = vsel %vm205, %v306, 0.0
  %vm309 = vcmask 523264
  %v311 = vsel %vm309, %v308, 0
  %313 = vmatprep.subr.mxu0 0.0
  %314 = vmatpush1.msra.mxu0 %v35
  %315 = vmatprep.subr.mxu0 0.0
  %316 = vmatpush1.msra.mxu0 %v36
  %317 = vmatprep.subr.mxu0 0.0
  %318 = vmatpush1.msra.mxu0 %v37
  %319 = vmatprep.subr.mxu0 0.0
  %320 = vmatpush1.msra.mxu0 %v38
  %321 = vmatprep.subr.mxu0 0.0
  %322 = vmatpush1.msra.mxu0 %v39
  %323 = vmatprep.subr.mxu0 0.0
  %324 = vmatpush1.msra.mxu0 %v40
  %325 = vmatprep.subr.mxu0 0.0
  %326 = vmatpush1.msra.mxu0 %v41
  %327 = vmatprep.subr.mxu0 0.0
  %328 = vmatpush1.msra.mxu0 %v42
  %329 = vmatprep.subr.mxu0 0.0
  %330 = vmatpush1.msra.mxu0 0.0
  %331 = vmatprep.subr.mxu0 0.0
  %332 = vmatpush1.msra.mxu0 0.0
  %333 = vmatprep.subr.mxu0 0.0
  %334 = vmatpush1.msra.mxu0 0.0
  %335 = vmatprep.subr.mxu0 0.0
  %336 = vmatpush1.msra.mxu0 0.0
  %337 = vmatprep.subr.mxu0 0.0
  %338 = vmatpush1.msra.mxu0 0.0
  %339 = vmatprep.subr.mxu0 0.0
  %340 = vmatpush1.msra.mxu0 0.0
  %341 = vmatprep.subr.mxu0 0.0
  %342 = vmatpush1.msra.mxu0 0.0
  %343 = vmatprep.subr.mxu0 0.0
  %344 = vmatpush1.msra.mxu0 0.0
  %345 = vmatprep.subr.mxu0 0.0
  %346 = vmatpush1.msra.mxu0 0.0
  %347 = vmatprep.subr.mxu0 0.0
  %348 = vmatpush1.msra.mxu0 0.0
  %349 = vmatprep.subr.mxu0 0.0
  %350 = vmatpush1.msra.mxu0 0.0
  %351 = vmatprep.subr.mxu0 0.0
  %352 = vmatpush1.msra.mxu0 0.0
  %353 = vmatprep.subr.mxu0 0.0
  %354 = vmatpush1.msra.mxu0 0.0
  %355 = vmatprep.subr.mxu0 0.0
  %356 = vmatpush1.msra.mxu0 0.0
  %357 = vmatprep.subr.mxu0 0.0
  %358 = vmatpush1.msra.mxu0 0.0
  %359 = vmatprep.subr.mxu0 0.0
  %360 = vmatpush1.msra.mxu0 0.0
  %361 = vmatprep.subr.mxu0 0.0
  %362 = vmatpush1.msra.mxu0 0.0
  %363 = vmatprep.subr.mxu0 0.0
  %364 = vmatpush1.msra.mxu0 0.0
  %365 = vmatprep.subr.mxu0 0.0
  %366 = vmatpush1.msra.mxu0 0.0
  %367 = vmatprep.subr.mxu0 0.0
  %368 = vmatpush1.msra.mxu0 0.0
  %369 = vmatprep.subr.mxu0 0.0
  %370 = vmatpush1.msra.mxu0 0.0
  %371 = vmatprep.subr.mxu0 0.0
  %372 = vmatpush1.msra.mxu0 0.0
  %373 = vmatprep.subr.mxu0 0.0
  %374 = vmatpush1.msra.mxu0 0.0
  %375 = vmatprep.subr.mxu0 0.0
  %376 = vmatpush1.msra.mxu0 0.0
  %377 = vmatprep.mubr.f32.mxu0 0.0
  %378 = vmatmul.mubr.f32.gmra.mrb[0].mxu0 %v311
  %v379 = vpop.f32.mrb[0].mxu0
  %v380 = vadd.f32 %v202, %v379
  %v381 = vpop.f32.mrb[0].mxu0
  %382 = vdwg.mxu0
  %v383 = vxor.u32 %v380, 2147483648
  %v384 = vmul.f32 %v383, 1.442695
  %v385 = vpow.pop %v384
  %v386 = vadd.f32 %v385, 1.0
  %v387 = vrcp.pop %v386
  %v388 = vmul.f32 1.0, %v387
  %v389 = vtanh.pop %v380
  %v390 = vmul.f32 %v388, 0.0
  %392 = vrot.lane.b32.xlu0 %v389, 64
  %v393 = vpop.permute.xlu0 %392
  %v395 = vmul.f32 %v388, %v393
  %397 = vrot.lane.b32.xlu0 %v395, 32
  %v398 = vpop.permute.xlu0 %397
  %v400 = vadd.f32 %v390, %v398
  %v401 = vtanh.pop %v400
  %403 = vrot.lane.b32.xlu0 %v401, 64
  %v404 = vpop.permute.xlu0 %403
  %v406 = vmul.f32 %v388, %v404
  %s407 = scalar_lea.vmem [#allocation2], 8
  %v408 = vld [vmem:[%s407] sm:$0xff]
  %v409 = vsel %vm205, %v306, 0
  %411 = vmatprep.subr.mxu0 0.0
  %412 = vmatpush1.msra.mxu0 %v31
  %413 = vmatprep.subr.mxu0 0.0
  %414 = vmatpush1.msra.mxu0 %v32
  %415 = vmatprep.subr.mxu0 0.0
  %416 = vmatpush1.msra.mxu0 %v33
  %417 = vmatprep.subr.mxu0 0.0
  %418 = vmatpush1.msra.mxu0 %v34
  %419 = vmatprep.subr.mxu0 0.0
  %420 = vmatpush1.msra.mxu0 0.0
  %421 = vmatprep.subr.mxu0 0.0
  %422 = vmatpush1.msra.mxu0 0.0
  %423 = vmatprep.subr.mxu0 0.0
  %424 = vmatpush1.msra.mxu0 0.0
  %425 = vmatprep.subr.mxu0 0.0
  %426 = vmatpush1.msra.mxu0 0.0
  %427 = vmatprep.subr.mxu0 0.0
  %428 = vmatpush1.msra.mxu0 0.0
  %429 = vmatprep.subr.mxu0 0.0
  %430 = vmatpush1.msra.mxu0 0.0
  %431 = vmatprep.subr.mxu0 0.0
  %432 = vmatpush1.msra.mxu0 0.0
  %433 = vmatprep.subr.mxu0 0.0
  %434 = vmatpush1.msra.mxu0 0.0
  %435 = vmatprep.subr.mxu0 0.0
  %436 = vmatpush1.msra.mxu0 0.0
  %437 = vmatprep.subr.mxu0 0.0
  %438 = vmatpush1.msra.mxu0 0.0
  %439 = vmatprep.subr.mxu0 0.0
  %440 = vmatpush1.msra.mxu0 0.0
  %441 = vmatprep.subr.mxu0 0.0
  %442 = vmatpush1.msra.mxu0 0.0
  %443 = vmatprep.subr.mxu0 0.0
  %444 = vmatpush1.msra.mxu0 0.0
  %445 = vmatprep.subr.mxu0 0.0
  %446 = vmatpush1.msra.mxu0 0.0
  %447 = vmatprep.subr.mxu0 0.0
  %448 = vmatpush1.msra.mxu0 0.0
  %449 = vmatprep.subr.mxu0 0.0
  %450 = vmatpush1.msra.mxu0 0.0
  %451 = vmatprep.subr.mxu0 0.0
  %452 = vmatpush1.msra.mxu0 0.0
  %453 = vmatprep.subr.mxu0 0.0
  %454 = vmatpush1.msra.mxu0 0.0
  %455 = vmatprep.subr.mxu0 0.0
  %456 = vmatpush1.msra.mxu0 0.0
  %457 = vmatprep.subr.mxu0 0.0
  %458 = vmatpush1.msra.mxu0 0.0
  %459 = vmatprep.subr.mxu0 0.0
  %460 = vmatpush1.msra.mxu0 0.0
  %461 = vmatprep.subr.mxu0 0.0
  %462 = vmatpush1.msra.mxu0 0.0
  %463 = vmatprep.subr.mxu0 0.0
  %464 = vmatpush1.msra.mxu0 0.0
  %465 = vmatprep.subr.mxu0 0.0
  %466 = vmatpush1.msra.mxu0 0.0
  %467 = vmatprep.subr.mxu0 0.0
  %468 = vmatpush1.msra.mxu0 0.0
  %469 = vmatprep.subr.mxu0 0.0
  %470 = vmatpush1.msra.mxu0 0.0
  %471 = vmatprep.subr.mxu0 0.0
  %472 = vmatpush1.msra.mxu0 0.0
  %473 = vmatprep.subr.mxu0 0.0
  %474 = vmatpush1.msra.mxu0 0.0
  %475 = vmatprep.mubr.f32.mxu0 0.0
  %476 = vmatmul.mubr.f32.gmra.mrb[0].mxu0 %v409
  %v477 = vpop.f32.mrb[0].mxu0
  %v478 = vadd.f32 0.0, %v477
  %v479 = vpop.f32.mrb[0].mxu0
  %480 = vdwg.mxu0
  %v481 = vadd.f32 %v408, %v478
  %v482 = vxor.u32 %v481, 2147483648
  %v483 = vmul.f32 %v482, 1.442695
  %v484 = vpow.pop %v483
  %v485 = vadd.f32 %v484, 1.0
  %v486 = vrcp.pop %v485
  %v487 = vmul.f32 1.0, %v486
  %v488 = vtanh.pop %v481
  %v489 = vmul.f32 %v487, %v297
  %491 = vrot.lane.b32.xlu0 %v488, 64
  %v492 = vpop.permute.xlu0 %491
  %v494 = vmul.f32 %v487, %v492
  %496 = vrot.lane.b32.xlu0 %v494, 32
  %v497 = vpop.permute.xlu0 %496
  %v499 = vadd.f32 %v489, %v497
  %v500 = vtanh.pop %v499
  %502 = vrot.lane.b32.xlu0 %v500, 64
  %v503 = vpop.permute.xlu0 %502
  %v505 = vmul.f32 %v487, %v503
  %507 = vrot.lane.b32.xlu0 %v505, 32
  %v508 = vpop.permute.xlu0 %507
  %511 = vrot.lane.b32.xlu0 %v406, 64
  %v512 = vpop.permute.xlu0 %511
  %v514 = vsel %vm205, %v508, %v512
  %v516 = vsel %vm309, %v514, 0
  %518 = vmatprep.subr.mxu0 0.0
  %519 = vmatpush1.msra.mxu0 %v35
  %520 = vmatprep.subr.mxu0 0.0
  %521 = vmatpush1.msra.mxu0 %v36
  %522 = vmatprep.subr.mxu0 0.0
  %523 = vmatpush1.msra.mxu0 %v37
  %524 = vmatprep.subr.mxu0 0.0
  %525 = vmatpush1.msra.mxu0 %v38
  %526 = vmatprep.subr.mxu0 0.0
  %527 = vmatpush1.msra.mxu0 %v39
  %528 = vmatprep.subr.mxu0 0.0
  %529 = vmatpush1.msra.mxu0 %v40
  %530 = vmatprep.subr.mxu0 0.0
  %531 = vmatpush1.msra.mxu0 %v41
  %532 = vmatprep.subr.mxu0 0.0
  %533 = vmatpush1.msra.mxu0 %v42
  %534 = vmatprep.subr.mxu0 0.0
  %535 = vmatpush1.msra.mxu0 0.0
  %536 = vmatprep.subr.mxu0 0.0
  %537 = vmatpush1.msra.mxu0 0.0
  %538 = vmatprep.subr.mxu0 0.0
  %539 = vmatpush1.msra.mxu0 0.0
  %540 = vmatprep.subr.mxu0 0.0
  %541 = vmatpush1.msra.mxu0 0.0
  %542 = vmatprep.subr.mxu0 0.0
  %543 = vmatpush1.msra.mxu0 0.0
  %544 = vmatprep.subr.mxu0 0.0
  %545 = vmatpush1.msra.mxu0 0.0
  %546 = vmatprep.subr.mxu0 0.0
  %547 = vmatpush1.msra.mxu0 0.0
  %548 = vmatprep.subr.mxu0 0.0
  %549 = vmatpush1.msra.mxu0 0.0
  %550 = vmatprep.subr.mxu0 0.0
  %551 = vmatpush1.msra.mxu0 0.0
  %552 = vmatprep.subr.mxu0 0.0
  %553 = vmatpush1.msra.mxu0 0.0
  %554 = vmatprep.subr.mxu0 0.0
  %555 = vmatpush1.msra.mxu0 0.0
  %556 = vmatprep.subr.mxu0 0.0
  %557 = vmatpush1.msra.mxu0 0.0
  %558 = vmatprep.subr.mxu0 0.0
  %559 = vmatpush1.msra.mxu0 0.0
  %560 = vmatprep.subr.mxu0 0.0
  %561 = vmatpush1.msra.mxu0 0.0
  %562 = vmatprep.subr.mxu0 0.0
  %563 = vmatpush1.msra.mxu0 0.0
  %564 = vmatprep.subr.mxu0 0.0
  %565 = vmatpush1.msra.mxu0 0.0
  %566 = vmatprep.subr.mxu0 0.0
  %567 = vmatpush1.msra.mxu0 0.0
  %568 = vmatprep.subr.mxu0 0.0
  %569 = vmatpush1.msra.mxu0 0.0
  %570 = vmatprep.subr.mxu0 0.0
  %571 = vmatpush1.msra.mxu0 0.0
  %572 = vmatprep.subr.mxu0 0.0
  %573 = vmatpush1.msra.mxu0 0.0
  %574 = vmatprep.subr.mxu0 0.0
  %575 = vmatpush1.msra.mxu0 0.0
  %576 = vmatprep.subr.mxu0 0.0
  %577 = vmatpush1.msra.mxu0 0.0
  %578 = vmatprep.subr.mxu0 0.0
  %579 = vmatpush1.msra.mxu0 0.0
  %580 = vmatprep.subr.mxu0 0.0
  %581 = vmatpush1.msra.mxu0 0.0
  %582 = vmatprep.mubr.f32.mxu0 0.0
  %583 = vmatmul.mubr.f32.gmra.mrb[0].mxu0 %v516
  %v584 = vpop.f32.mrb[0].mxu0
  %v585 = vadd.f32 %v202, %v584
  %v586 = vpop.f32.mrb[0].mxu0
  %587 = vdwg.mxu0
  %v588 = vxor.u32 %v585, 2147483648
  %v589 = vmul.f32 %v588, 1.442695
  %v590 = vpow.pop %v589
  %v591 = vadd.f32 %v590, 1.0
  %v592 = vrcp.pop %v591
  %v593 = vmul.f32 1.0, %v592
  %v594 = vtanh.pop %v585
  %v595 = vmul.f32 %v593, %v400
  %597 = vrot.lane.b32.xlu0 %v594, 64
  %v598 = vpop.permute.xlu0 %597
  %v600 = vmul.f32 %v593, %v598
  %602 = vrot.lane.b32.xlu0 %v600, 32
  %v603 = vpop.permute.xlu0 %602
  %v605 = vadd.f32 %v595, %v603
  %v606 = vtanh.pop %v605
  %608 = vrot.lane.b32.xlu0 %v606, 64
  %v609 = vpop.permute.xlu0 %608
  %v611 = vmul.f32 %v593, %v609
  %s612 = scalar_lea.vmem [#allocation2], 16
  %v613 = vld [vmem:[%s612] sm:$0xff]
  %v614 = vsel %vm205, %v508, 0
  %616 = vmatprep.subr.mxu0 0.0
  %617 = vmatpush1.msra.mxu0 %v31
  %618 = vmatprep.subr.mxu0 0.0
  %619 = vmatpush1.msra.mxu0 %v32
  %620 = vmatprep.subr.mxu0 0.0
  %621 = vmatpush1.msra.mxu0 %v33
  %622 = vmatprep.subr.mxu0 0.0
  %623 = vmatpush1.msra.mxu0 %v34
  %624 = vmatprep.subr.mxu0 0.0
  %625 = vmatpush1.msra.mxu0 0.0
  %626 = vmatprep.subr.mxu0 0.0
  %627 = vmatpush1.msra.mxu0 0.0
  %628 = vmatprep.subr.mxu0 0.0
  %629 = vmatpush1.msra.mxu0 0.0
  %630 = vmatprep.subr.mxu0 0.0
  %631 = vmatpush1.msra.mxu0 0.0
  %632 = vmatprep.subr.mxu0 0.0
  %633 = vmatpush1.msra.mxu0 0.0
  %634 = vmatprep.subr.mxu0 0.0
  %635 = vmatpush1.msra.mxu0 0.0
  %636 = vmatprep.subr.mxu0 0.0
  %637 = vmatpush1.msra.mxu0 0.0
  %638 = vmatprep.subr.mxu0 0.0
  %639 = vmatpush1.msra.mxu0 0.0
  %640 = vmatprep.subr.mxu0 0.0
  %641 = vmatpush1.msra.mxu0 0.0
  %642 = vmatprep.subr.mxu0 0.0
  %643 = vmatpush1.msra.mxu0 0.0
  %644 = vmatprep.subr.mxu0 0.0
  %645 = vmatpush1.msra.mxu0 0.0
  %646 = vmatprep.subr.mxu0 0.0
  %647 = vmatpush1.msra.mxu0 0.0
  %648 = vmatprep.subr.mxu0 0.0
  %649 = vmatpush1.msra.mxu0 0.0
  %650 = vmatprep.subr.mxu0 0.0
  %651 = vmatpush1.msra.mxu0 0.0
  %652 = vmatprep.subr.mxu0 0.0
  %653 = vmatpush1.msra.mxu0 0.0
  %654 = vmatprep.subr.mxu0 0.0
  %655 = vmatpush1.msra.mxu0 0.0
  %656 = vmatprep.subr.mxu0 0.0
  %657 = vmatpush1.msra.mxu0 0.0
  %658 = vmatprep.subr.mxu0 0.0
  %659 = vmatpush1.msra.mxu0 0.0
  %660 = vmatprep.subr.mxu0 0.0
  %661 = vmatpush1.msra.mxu0 0.0
  %662 = vmatprep.subr.mxu0 0.0
  %663 = vmatpush1.msra.mxu0 0.0
  %664 = vmatprep.subr.mxu0 0.0
  %665 = vmatpush1.msra.mxu0 0.0
  %666 = vmatprep.subr.mxu0 0.0
  %667 = vmatpush1.msra.mxu0 0.0
  %668 = vmatprep.subr.mxu0 0.0
  %669 = vmatpush1.msra.mxu0 0.0
  %670 = vmatprep.subr.mxu0 0.0
  %671 = vmatpush1.msra.mxu0 0.0
  %672 = vmatprep.subr.mxu0 0.0
  %673 = vmatpush1.msra.mxu0 0.0
  %674 = vmatprep.subr.mxu0 0.0
  %675 = vmatpush1.msra.mxu0 0.0
  %676 = vmatprep.subr.mxu0 0.0
  %677 = vmatpush1.msra.mxu0 0.0
  %678 = vmatprep.subr.mxu0 0.0
  %679 = vmatpush1.msra.mxu0 0.0
  %680 = vmatprep.mubr.f32.mxu0 0.0
  %681 = vmatmul.mubr.f32.gmra.mrb[0].mxu0 %v614
  %v682 = vpop.f32.mrb[0].mxu0
  %v683 = vadd.f32 0.0, %v682
  %v684 = vpop.f32.mrb[0].mxu0
  %685 = vdwg.mxu0
  %v686 = vadd.f32 %v613, %v683
  %v687 = vxor.u32 %v686, 2147483648
  %v688 = vmul.f32 %v687, 1.442695
  %v689 = vpow.pop %v688
  %v690 = vadd.f32 %v689, 1.0
  %v691 = vrcp.pop %v690
  %v692 = vmul.f32 1.0, %v691
  %v693 = vtanh.pop %v686
  %v694 = vmul.f32 %v692, %v499
  %696 = vrot.lane.b32.xlu0 %v693, 64
  %v697 = vpop.permute.xlu0 %696
  %v699 = vmul.f32 %v692, %v697
  %701 = vrot.lane.b32.xlu0 %v699, 32
  %v702 = vpop.permute.xlu0 %701
  %v704 = vadd.f32 %v694, %v702
  %v705 = vtanh.pop %v704
  %707 = vrot.lane.b32.xlu0 %v705, 64
  %v708 = vpop.permute.xlu0 %707
  %v710 = vmul.f32 %v692, %v708
  %712 = vrot.lane.b32.xlu0 %v710, 32
  %v713 = vpop.permute.xlu0 %712
  %716 = vrot.lane.b32.xlu0 %v611, 64
  %v717 = vpop.permute.xlu0 %716
  %v719 = vsel %vm205, %v713, %v717
  %v721 = vsel %vm309, %v719, 0
  %723 = vmatprep.subr.mxu0 0.0
  %724 = vmatpush1.msra.mxu0 %v35
  %725 = vmatprep.subr.mxu0 0.0
  %726 = vmatpush1.msra.mxu0 %v36
  %727 = vmatprep.subr.mxu0 0.0
  %728 = vmatpush1.msra.mxu0 %v37
  %729 = vmatprep.subr.mxu0 0.0
  %730 = vmatpush1.msra.mxu0 %v38
  %731 = vmatprep.subr.mxu0 0.0
  %732 = vmatpush1.msra.mxu0 %v39
  %733 = vmatprep.subr.mxu0 0.0
  %734 = vmatpush1.msra.mxu0 %v40
  %735 = vmatprep.subr.mxu0 0.0
  %736 = vmatpush1.msra.mxu0 %v41
  %737 = vmatprep.subr.mxu0 0.0
  %738 = vmatpush1.msra.mxu0 %v42
  %739 = vmatprep.subr.mxu0 0.0
  %740 = vmatpush1.msra.mxu0 0.0
  %741 = vmatprep.subr.mxu0 0.0
  %742 = vmatpush1.msra.mxu0 0.0
  %743 = vmatprep.subr.mxu0 0.0
  %744 = vmatpush1.msra.mxu0 0.0
  %745 = vmatprep.subr.mxu0 0.0
  %746 = vmatpush1.msra.mxu0 0.0
  %747 = vmatprep.subr.mxu0 0.0
  %748 = vmatpush1.msra.mxu0 0.0
  %749 = vmatprep.subr.mxu0 0.0
  %750 = vmatpush1.msra.mxu0 0.0
  %751 = vmatprep.subr.mxu0 0.0
  %752 = vmatpush1.msra.mxu0 0.0
  %753 = vmatprep.subr.mxu0 0.0
  %754 = vmatpush1.msra.mxu0 0.0
  %755 = vmatprep.subr.mxu0 0.0
  %756 = vmatpush1.msra.mxu0 0.0
  %757 = vmatprep.subr.mxu0 0.0
  %758 = vmatpush1.msra.mxu0 0.0
  %759 = vmatprep.subr.mxu0 0.0
  %760 = vmatpush1.msra.mxu0 0.0
  %761 = vmatprep.subr.mxu0 0.0
  %762 = vmatpush1.msra.mxu0 0.0
  %763 = vmatprep.subr.mxu0 0.0
  %764 = vmatpush1.msra.mxu0 0.0
  %765 = vmatprep.subr.mxu0 0.0
  %766 = vmatpush1.msra.mxu0 0.0
  %767 = vmatprep.subr.mxu0 0.0
  %768 = vmatpush1.msra.mxu0 0.0
  %769 = vmatprep.subr.mxu0 0.0
  %770 = vmatpush1.msra.mxu0 0.0
  %771 = vmatprep.subr.mxu0 0.0
  %772 = vmatpush1.msra.mxu0 0.0
  %773 = vmatprep.subr.mxu0 0.0
  %774 = vmatpush1.msra.mxu0 0.0
  %775 = vmatprep.subr.mxu0 0.0
  %776 = vmatpush1.msra.mxu0 0.0
  %777 = vmatprep.subr.mxu0 0.0
  %778 = vmatpush1.msra.mxu0 0.0
  %779 = vmatprep.subr.mxu0 0.0
  %780 = vmatpush1.msra.mxu0 0.0
  %781 = vmatprep.subr.mxu0 0.0
  %782 = vmatpush1.msra.mxu0 0.0
  %783 = vmatprep.subr.mxu0 0.0
  %784 = vmatpush1.msra.mxu0 0.0
  %785 = vmatprep.subr.mxu0 0.0
  %786 = vmatpush1.msra.mxu0 0.0
  %787 = vmatprep.mubr.f32.mxu0 0.0
  %788 = vmatmul.mubr.f32.gmra.mrb[0].mxu0 %v721
  %v789 = vpop.f32.mrb[0].mxu0
  %v790 = vadd.f32 %v202, %v789
  %v791 = vpop.f32.mrb[0].mxu0
  %792 = vdwg.mxu0
  %v793 = vxor.u32 %v790, 2147483648
  %v794 = vmul.f32 %v793, 1.442695
  %v795 = vpow.pop %v794
  %v796 = vadd.f32 %v795, 1.0
  %v797 = vrcp.pop %v796
  %v798 = vmul.f32 1.0, %v797
  %v799 = vtanh.pop %v790
  %v800 = vmul.f32 %v798, %v605
  %802 = vrot.lane.b32.xlu0 %v799, 64
  %v803 = vpop.permute.xlu0 %802
  %v805 = vmul.f32 %v798, %v803
  %807 = vrot.lane.b32.xlu0 %v805, 32
  %v808 = vpop.permute.xlu0 %807
  %v810 = vadd.f32 %v800, %v808
  %v811 = vtanh.pop %v810
  %813 = vrot.lane.b32.xlu0 %v811, 64
  %v814 = vpop.permute.xlu0 %813
  %v816 = vmul.f32 %v798, %v814
  %s817 = scalar_lea.vmem [#allocation2], 24
  %v818 = vld [vmem:[%s817] sm:$0xff]
  %v819 = vsel %vm205, %v713, 0
  %821 = vmatprep.subr.mxu0 0.0
  %822 = vmatpush1.msra.mxu0 %v31
  %823 = vmatprep.subr.mxu0 0.0
  %824 = vmatpush1.msra.mxu0 %v32
  %825 = vmatprep.subr.mxu0 0.0
  %826 = vmatpush1.msra.mxu0 %v33
  %827 = vmatprep.subr.mxu0 0.0
  %828 = vmatpush1.msra.mxu0 %v34
  %829 = vmatprep.subr.mxu0 0.0
  %830 = vmatpush1.msra.mxu0 0.0
  %831 = vmatprep.subr.mxu0 0.0
  %832 = vmatpush1.msra.mxu0 0.0
  %833 = vmatprep.subr.mxu0 0.0
  %834 = vmatpush1.msra.mxu0 0.0
  %835 = vmatprep.subr.mxu0 0.0
  %836 = vmatpush1.msra.mxu0 0.0
  %837 = vmatprep.subr.mxu0 0.0
  %838 = vmatpush1.msra.mxu0 0.0
  %839 = vmatprep.subr.mxu0 0.0
  %840 = vmatpush1.msra.mxu0 0.0
  %841 = vmatprep.subr.mxu0 0.0
  %842 = vmatpush1.msra.mxu0 0.0
  %843 = vmatprep.subr.mxu0 0.0
  %844 = vmatpush1.msra.mxu0 0.0
  %845 = vmatprep.subr.mxu0 0.0
  %846 = vmatpush1.msra.mxu0 0.0
  %847 = vmatprep.subr.mxu0 0.0
  %848 = vmatpush1.msra.mxu0 0.0
  %849 = vmatprep.subr.mxu0 0.0
  %850 = vmatpush1.msra.mxu0 0.0
  %851 = vmatprep.subr.mxu0 0.0
  %852 = vmatpush1.msra.mxu0 0.0
  %853 = vmatprep.subr.mxu0 0.0
  %854 = vmatpush1.msra.mxu0 0.0
  %855 = vmatprep.subr.mxu0 0.0
  %856 = vmatpush1.msra.mxu0 0.0
  %857 = vmatprep.subr.mxu0 0.0
  %858 = vmatpush1.msra.mxu0 0.0
  %859 = vmatprep.subr.mxu0 0.0
  %860 = vmatpush1.msra.mxu0 0.0
  %861 = vmatprep.subr.mxu0 0.0
  %862 = vmatpush1.msra.mxu0 0.0
  %863 = vmatprep.subr.mxu0 0.0
  %864 = vmatpush1.msra.mxu0 0.0
  %865 = vmatprep.subr.mxu0 0.0
  %866 = vmatpush1.msra.mxu0 0.0
  %867 = vmatprep.subr.mxu0 0.0
  %868 = vmatpush1.msra.mxu0 0.0
  %869 = vmatprep.subr.mxu0 0.0
  %870 = vmatpush1.msra.mxu0 0.0
  %871 = vmatprep.subr.mxu0 0.0
  %872 = vmatpush1.msra.mxu0 0.0
  %873 = vmatprep.subr.mxu0 0.0
  %874 = vmatpush1.msra.mxu0 0.0
  %875 = vmatprep.subr.mxu0 0.0
  %876 = vmatpush1.msra.mxu0 0.0
  %877 = vmatprep.subr.mxu0 0.0
  %878 = vmatpush1.msra.mxu0 0.0
  %879 = vmatprep.subr.mxu0 0.0
  %880 = vmatpush1.msra.mxu0 0.0
  %881 = vmatprep.subr.mxu0 0.0
  %882 = vmatpush1.msra.mxu0 0.0
  %883 = vmatprep.subr.mxu0 0.0
  %884 = vmatpush1.msra.mxu0 0.0
  %885 = vmatprep.mubr.f32.mxu0 0.0
  %886 = vmatmul.mubr.f32.gmra.mrb[0].mxu0 %v819
  %v887 = vpop.f32.mrb[0].mxu0
  %v888 = vadd.f32 0.0, %v887
  %v889 = vpop.f32.mrb[0].mxu0
  %890 = vdwg.mxu0
  %v891 = vadd.f32 %v818, %v888
  %v892 = vxor.u32 %v891, 2147483648
  %v893 = vmul.f32 %v892, 1.442695
  %v894 = vpow.pop %v893
  %v895 = vadd.f32 %v894, 1.0
  %v896 = vrcp.pop %v895
  %v897 = vmul.f32 1.0, %v896
  %v898 = vtanh.pop %v891
  %v899 = vmul.f32 %v897, %v704
  %901 = vrot.lane.b32.xlu0 %v898, 64
  %v902 = vpop.permute.xlu0 %901
  %v904 = vmul.f32 %v897, %v902
  %906 = vrot.lane.b32.xlu0 %v904, 32
  %v907 = vpop.permute.xlu0 %906
  %v909 = vadd.f32 %v899, %v907
  %v910 = vtanh.pop %v909
  %912 = vrot.lane.b32.xlu0 %v910, 64
  %v913 = vpop.permute.xlu0 %912
  %v915 = vmul.f32 %v897, %v913
  %917 = vrot.lane.b32.xlu0 %v915, 32
  %v918 = vpop.permute.xlu0 %917
  %921 = vrot.lane.b32.xlu0 %v816, 64
  %v922 = vpop.permute.xlu0 %921
  %v924 = vsel %vm205, %v918, %v922
  %v926 = vsel %vm309, %v924, 0
  %928 = vmatprep.subr.mxu0 0.0
  %929 = vmatpush1.msra.mxu0 %v35
  %930 = vmatprep.subr.mxu0 0.0
  %931 = vmatpush1.msra.mxu0 %v36
  %932 = vmatprep.subr.mxu0 0.0
  %933 = vmatpush1.msra.mxu0 %v37
  %934 = vmatprep.subr.mxu0 0.0
  %935 = vmatpush1.msra.mxu0 %v38
  %936 = vmatprep.subr.mxu0 0.0
  %937 = vmatpush1.msra.mxu0 %v39
  %938 = vmatprep.subr.mxu0 0.0
  %939 = vmatpush1.msra.mxu0 %v40
  %940 = vmatprep.subr.mxu0 0.0
  %941 = vmatpush1.msra.mxu0 %v41
  %942 = vmatprep.subr.mxu0 0.0
  %943 = vmatpush1.msra.mxu0 %v42
  %944 = vmatprep.subr.mxu0 0.0
  %945 = vmatpush1.msra.mxu0 0.0
  %946 = vmatprep.subr.mxu0 0.0
  %947 = vmatpush1.msra.mxu0 0.0
  %948 = vmatprep.subr.mxu0 0.0
  %949 = vmatpush1.msra.mxu0 0.0
  %950 = vmatprep.subr.mxu0 0.0
  %951 = vmatpush1.msra.mxu0 0.0
  %952 = vmatprep.subr.mxu0 0.0
  %953 = vmatpush1.msra.mxu0 0.0
  %954 = vmatprep.subr.mxu0 0.0
  %955 = vmatpush1.msra.mxu0 0.0
  %956 = vmatprep.subr.mxu0 0.0
  %957 = vmatpush1.msra.mxu0 0.0
  %958 = vmatprep.subr.mxu0 0.0
  %959 = vmatpush1.msra.mxu0 0.0
  %960 = vmatprep.subr.mxu0 0.0
  %961 = vmatpush1.msra.mxu0 0.0
  %962 = vmatprep.subr.mxu0 0.0
  %963 = vmatpush1.msra.mxu0 0.0
  %964 = vmatprep.subr.mxu0 0.0
  %965 = vmatpush1.msra.mxu0 0.0
  %966 = vmatprep.subr.mxu0 0.0
  %967 = vmatpush1.msra.mxu0 0.0
  %968 = vmatprep.subr.mxu0 0.0
  %969 = vmatpush1.msra.mxu0 0.0
  %970 = vmatprep.subr.mxu0 0.0
  %971 = vmatpush1.msra.mxu0 0.0
  %972 = vmatprep.subr.mxu0 0.0
  %973 = vmatpush1.msra.mxu0 0.0
  %974 = vmatprep.subr.mxu0 0.0
  %975 = vmatpush1.msra.mxu0 0.0
  %976 = vmatprep.subr.mxu0 0.0
  %977 = vmatpush1.msra.mxu0 0.0
  %978 = vmatprep.subr.mxu0 0.0
  %979 = vmatpush1.msra.mxu0 0.0
  %980 = vmatprep.subr.mxu0 0.0
  %981 = vmatpush1.msra.mxu0 0.0
  %982 = vmatprep.subr.mxu0 0.0
  %983 = vmatpush1.msra.mxu0 0.0
  %984 = vmatprep.subr.mxu0 0.0
  %985 = vmatpush1.msra.mxu0 0.0
  %986 = vmatprep.subr.mxu0 0.0
  %987 = vmatpush1.msra.mxu0 0.0
  %988 = vmatprep.subr.mxu0 0.0
  %989 = vmatpush1.msra.mxu0 0.0
  %990 = vmatprep.subr.mxu0 0.0
  %991 = vmatpush1.msra.mxu0 0.0
  %992 = vmatprep.mubr.f32.mxu0 0.0
  %993 = vmatmul.mubr.f32.gmra.mrb[0].mxu0 %v926
  %v994 = vpop.f32.mrb[0].mxu0
  %v995 = vadd.f32 %v202, %v994
  %v996 = vpop.f32.mrb[0].mxu0
  %997 = vdwg.mxu0
  %v998 = vxor.u32 %v995, 2147483648
  %v999 = vmul.f32 %v998, 1.442695
  %v1000 = vpow.pop %v999
  %v1001 = vadd.f32 %v1000, 1.0
  %v1002 = vrcp.pop %v1001
  %v1003 = vmul.f32 1.0, %v1002
  %v1004 = vtanh.pop %v995
  %v1005 = vmul.f32 %v1003, %v810
  %1007 = vrot.lane.b32.xlu0 %v1004, 64
  %v1008 = vpop.permute.xlu0 %1007
  %v1010 = vmul.f32 %v1003, %v1008
  %1012 = vrot.lane.b32.xlu0 %v1010, 32
  %v1013 = vpop.permute.xlu0 %1012
  %v1015 = vadd.f32 %v1005, %v1013
  %v1016 = vtanh.pop %v1015
  %1018 = vrot.lane.b32.xlu0 %v1016, 64
  %v1019 = vpop.permute.xlu0 %1018
  %v1021 = vmul.f32 %v1003, %v1019
  %s1022 = scalar_lea.vmem [#allocation2], 32
  %v1023 = vld [vmem:[%s1022] sm:$0xff]
  %v1024 = vsel %vm205, %v918, 0
  %1026 = vmatprep.subr.mxu0 0.0
  %1027 = vmatpush1.msra.mxu0 %v31
  %1028 = vmatprep.subr.mxu0 0.0
  %1029 = vmatpush1.msra.mxu0 %v32
  %1030 = vmatprep.subr.mxu0 0.0
  %1031 = vmatpush1.msra.mxu0 %v33
  %1032 = vmatprep.subr.mxu0 0.0
  %1033 = vmatpush1.msra.mxu0 %v34
  %1034 = vmatprep.subr.mxu0 0.0
  %1035 = vmatpush1.msra.mxu0 0.0
  %1036 = vmatprep.subr.mxu0 0.0
  %1037 = vmatpush1.msra.mxu0 0.0
  %1038 = vmatprep.subr.mxu0 0.0
  %1039 = vmatpush1.msra.mxu0 0.0
  %1040 = vmatprep.subr.mxu0 0.0
  %1041 = vmatpush1.msra.mxu0 0.0
  %1042 = vmatprep.subr.mxu0 0.0
  %1043 = vmatpush1.msra.mxu0 0.0
  %1044 = vmatprep.subr.mxu0 0.0
  %1045 = vmatpush1.msra.mxu0 0.0
  %1046 = vmatprep.subr.mxu0 0.0
  %1047 = vmatpush1.msra.mxu0 0.0
  %1048 = vmatprep.subr.mxu0 0.0
  %1049 = vmatpush1.msra.mxu0 0.0
  %1050 = vmatprep.subr.mxu0 0.0
  %1051 = vmatpush1.msra.mxu0 0.0
  %1052 = vmatprep.subr.mxu0 0.0
  %1053 = vmatpush1.msra.mxu0 0.0
  %1054 = vmatprep.subr.mxu0 0.0
  %1055 = vmatpush1.msra.mxu0 0.0
  %1056 = vmatprep.subr.mxu0 0.0
  %1057 = vmatpush1.msra.mxu0 0.0
  %1058 = vmatprep.subr.mxu0 0.0
  %1059 = vmatpush1.msra.mxu0 0.0
  %1060 = vmatprep.subr.mxu0 0.0
  %1061 = vmatpush1.msra.mxu0 0.0
  %1062 = vmatprep.subr.mxu0 0.0
  %1063 = vmatpush1.msra.mxu0 0.0
  %1064 = vmatprep.subr.mxu0 0.0
  %1065 = vmatpush1.msra.mxu0 0.0
  %1066 = vmatprep.subr.mxu0 0.0
  %1067 = vmatpush1.msra.mxu0 0.0
  %1068 = vmatprep.subr.mxu0 0.0
  %1069 = vmatpush1.msra.mxu0 0.0
  %1070 = vmatprep.subr.mxu0 0.0
  %1071 = vmatpush1.msra.mxu0 0.0
  %1072 = vmatprep.subr.mxu0 0.0
  %1073 = vmatpush1.msra.mxu0 0.0
  %1074 = vmatprep.subr.mxu0 0.0
  %1075 = vmatpush1.msra.mxu0 0.0
  %1076 = vmatprep.subr.mxu0 0.0
  %1077 = vmatpush1.msra.mxu0 0.0
  %1078 = vmatprep.subr.mxu0 0.0
  %1079 = vmatpush1.msra.mxu0 0.0
  %1080 = vmatprep.subr.mxu0 0.0
  %1081 = vmatpush1.msra.mxu0 0.0
  %1082 = vmatprep.subr.mxu0 0.0
  %1083 = vmatpush1.msra.mxu0 0.0
  %1084 = vmatprep.subr.mxu0 0.0
  %1085 = vmatpush1.msra.mxu0 0.0
  %1086 = vmatprep.subr.mxu0 0.0
  %1087 = vmatpush1.msra.mxu0 0.0
  %1088 = vmatprep.subr.mxu0 0.0
  %1089 = vmatpush1.msra.mxu0 0.0
  %1090 = vmatprep.mubr.f32.mxu0 0.0
  %1091 = vmatmul.mubr.f32.gmra.mrb[0].mxu0 %v1024
  %v1092 = vpop.f32.mrb[0].mxu0
  %v1093 = vadd.f32 0.0, %v1092
  %v1094 = vpop.f32.mrb[0].mxu0
  %1095 = vdwg.mxu0
  %v1096 = vadd.f32 %v1023, %v1093
  %v1097 = vxor.u32 %v1096, 2147483648
  %v1098 = vmul.f32 %v1097, 1.442695
  %v1099 = vpow.pop %v1098
  %v1100 = vadd.f32 %v1099, 1.0
  %v1101 = vrcp.pop %v1100
  %v1102 = vmul.f32 1.0, %v1101
  %v1103 = vtanh.pop %v1096
  %v1104 = vmul.f32 %v1102, %v909
  %1106 = vrot.lane.b32.xlu0 %v1103, 64
  %v1107 = vpop.permute.xlu0 %1106
  %v1109 = vmul.f32 %v1102, %v1107
  %1111 = vrot.lane.b32.xlu0 %v1109, 32
  %v1112 = vpop.permute.xlu0 %1111
  %v1114 = vadd.f32 %v1104, %v1112
  %v1115 = vtanh.pop %v1114
  %1117 = vrot.lane.b32.xlu0 %v1115, 64
  %v1118 = vpop.permute.xlu0 %1117
  %v1120 = vmul.f32 %v1102, %v1118
  %1122 = vrot.lane.b32.xlu0 %v1120, 32
  %v1123 = vpop.permute.xlu0 %1122
  %1126 = vrot.lane.b32.xlu0 %v1021, 64
  %v1127 = vpop.permute.xlu0 %1126
  %v1129 = vsel %vm205, %v1123, %v1127
  %v1131 = vsel %vm309, %v1129, 0
  %1133 = vmatprep.subr.mxu0 0.0
  %1134 = vmatpush1.msra.mxu0 %v35
  %1135 = vmatprep.subr.mxu0 0.0
  %1136 = vmatpush1.msra.mxu0 %v36
  %1137 = vmatprep.subr.mxu0 0.0
  %1138 = vmatpush1.msra.mxu0 %v37
  %1139 = vmatprep.subr.mxu0 0.0
  %1140 = vmatpush1.msra.mxu0 %v38
  %1141 = vmatprep.subr.mxu0 0.0
  %1142 = vmatpush1.msra.mxu0 %v39
  %1143 = vmatprep.subr.mxu0 0.0
  %1144 = vmatpush1.msra.mxu0 %v40
  %1145 = vmatprep.subr.mxu0 0.0
  %1146 = vmatpush1.msra.mxu0 %v41
  %1147 = vmatprep.subr.mxu0 0.0
  %1148 = vmatpush1.msra.mxu0 %v42
  %1149 = vmatprep.subr.mxu0 0.0
  %1150 = vmatpush1.msra.mxu0 0.0
  %1151 = vmatprep.subr.mxu0 0.0
  %1152 = vmatpush1.msra.mxu0 0.0
  %1153 = vmatprep.subr.mxu0 0.0
  %1154 = vmatpush1.msra.mxu0 0.0
  %1155 = vmatprep.subr.mxu0 0.0
  %1156 = vmatpush1.msra.mxu0 0.0
  %1157 = vmatprep.subr.mxu0 0.0
  %1158 = vmatpush1.msra.mxu0 0.0
  %1159 = vmatprep.subr.mxu0 0.0
  %1160 = vmatpush1.msra.mxu0 0.0
  %1161 = vmatprep.subr.mxu0 0.0
  %1162 = vmatpush1.msra.mxu0 0.0
  %1163 = vmatprep.subr.mxu0 0.0
  %1164 = vmatpush1.msra.mxu0 0.0
  %1165 = vmatprep.subr.mxu0 0.0
  %1166 = vmatpush1.msra.mxu0 0.0
  %1167 = vmatprep.subr.mxu0 0.0
  %1168 = vmatpush1.msra.mxu0 0.0
  %1169 = vmatprep.subr.mxu0 0.0
  %1170 = vmatpush1.msra.mxu0 0.0
  %1171 = vmatprep.subr.mxu0 0.0
  %1172 = vmatpush1.msra.mxu0 0.0
  %1173 = vmatprep.subr.mxu0 0.0
  %1174 = vmatpush1.msra.mxu0 0.0
  %1175 = vmatprep.subr.mxu0 0.0
  %1176 = vmatpush1.msra.mxu0 0.0
  %1177 = vmatprep.subr.mxu0 0.0
  %1178 = vmatpush1.msra.mxu0 0.0
  %1179 = vmatprep.subr.mxu0 0.0
  %1180 = vmatpush1.msra.mxu0 0.0
  %1181 = vmatprep.subr.mxu0 0.0
  %1182 = vmatpush1.msra.mxu0 0.0
  %1183 = vmatprep.subr.mxu0 0.0
  %1184 = vmatpush1.msra.mxu0 0.0
  %1185 = vmatprep.subr.mxu0 0.0
  %1186 = vmatpush1.msra.mxu0 0.0
  %1187 = vmatprep.subr.mxu0 0.0
  %1188 = vmatpush1.msra.mxu0 0.0
  %1189 = vmatprep.subr.mxu0 0.0
  %1190 = vmatpush1.msra.mxu0 0.0
  %1191 = vmatprep.subr.mxu0 0.0
  %1192 = vmatpush1.msra.mxu0 0.0
  %1193 = vmatprep.subr.mxu0 0.0
  %1194 = vmatpush1.msra.mxu0 0.0
  %1195 = vmatprep.subr.mxu0 0.0
  %1196 = vmatpush1.msra.mxu0 0.0
  %1197 = vmatprep.mubr.f32.mxu0 0.0
  %1198 = vmatmul.mubr.f32.gmra.mrb[0].mxu0 %v1131
  %v1199 = vpop.f32.mrb[0].mxu0
  %v1200 = vadd.f32 %v202, %v1199
  %v1201 = vpop.f32.mrb[0].mxu0
  %1202 = vdwg.mxu0
  %v1203 = vxor.u32 %v1200, 2147483648
  %v1204 = vmul.f32 %v1203, 1.442695
  %v1205 = vpow.pop %v1204
  %v1206 = vadd.f32 %v1205, 1.0
  %v1207 = vrcp.pop %v1206
  %v1208 = vmul.f32 1.0, %v1207
  %v1209 = vtanh.pop %v1200
  %v1210 = vmul.f32 %v1208, %v1015
  %1212 = vrot.lane.b32.xlu0 %v1209, 64
  %v1213 = vpop.permute.xlu0 %1212
  %v1215 = vmul.f32 %v1208, %v1213
  %1217 = vrot.lane.b32.xlu0 %v1215, 32
  %v1218 = vpop.permute.xlu0 %1217
  %v1220 = vadd.f32 %v1210, %v1218
  %v1221 = vtanh.pop %v1220
  %1223 = vrot.lane.b32.xlu0 %v1221, 64
  %v1224 = vpop.permute.xlu0 %1223
  %v1226 = vmul.f32 %v1208, %v1224
  %s1227 = scalar_lea.vmem [#allocation2], 40
  %v1228 = vld [vmem:[%s1227] sm:$0xff]
  %v1229 = vsel %vm205, %v1123, 0
  %1231 = vmatprep.subr.mxu0 0.0
  %1232 = vmatpush1.msra.mxu0 %v31
  %1233 = vmatprep.subr.mxu0 0.0
  %1234 = vmatpush1.msra.mxu0 %v32
  %1235 = vmatprep.subr.mxu0 0.0
  %1236 = vmatpush1.msra.mxu0 %v33
  %1237 = vmatprep.subr.mxu0 0.0
  %1238 = vmatpush1.msra.mxu0 %v34
  %1239 = vmatprep.subr.mxu0 0.0
  %1240 = vmatpush1.msra.mxu0 0.0
  %1241 = vmatprep.subr.mxu0 0.0
  %1242 = vmatpush1.msra.mxu0 0.0
  %1243 = vmatprep.subr.mxu0 0.0
  %1244 = vmatpush1.msra.mxu0 0.0
  %1245 = vmatprep.subr.mxu0 0.0
  %1246 = vmatpush1.msra.mxu0 0.0
  %1247 = vmatprep.subr.mxu0 0.0
  %1248 = vmatpush1.msra.mxu0 0.0
  %1249 = vmatprep.subr.mxu0 0.0
  %1250 = vmatpush1.msra.mxu0 0.0
  %1251 = vmatprep.subr.mxu0 0.0
  %1252 = vmatpush1.msra.mxu0 0.0
  %1253 = vmatprep.subr.mxu0 0.0
  %1254 = vmatpush1.msra.mxu0 0.0
  %1255 = vmatprep.subr.mxu0 0.0
  %1256 = vmatpush1.msra.mxu0 0.0
  %1257 = vmatprep.subr.mxu0 0.0
  %1258 = vmatpush1.msra.mxu0 0.0
  %1259 = vmatprep.subr.mxu0 0.0
  %1260 = vmatpush1.msra.mxu0 0.0
  %1261 = vmatprep.subr.mxu0 0.0
  %1262 = vmatpush1.msra.mxu0 0.0
  %1263 = vmatprep.subr.mxu0 0.0
  %1264 = vmatpush1.msra.mxu0 0.0
  %1265 = vmatprep.subr.mxu0 0.0
  %1266 = vmatpush1.msra.mxu0 0.0
  %1267 = vmatprep.subr.mxu0 0.0
  %1268 = vmatpush1.msra.mxu0 0.0
  %1269 = vmatprep.subr.mxu0 0.0
  %1270 = vmatpush1.msra.mxu0 0.0
  %1271 = vmatprep.subr.mxu0 0.0
  %1272 = vmatpush1.msra.mxu0 0.0
  %1273 = vmatprep.subr.mxu0 0.0
  %1274 = vmatpush1.msra.mxu0 0.0
  %1275 = vmatprep.subr.mxu0 0.0
  %1276 = vmatpush1.msra.mxu0 0.0
  %1277 = vmatprep.subr.mxu0 0.0
  %1278 = vmatpush1.msra.mxu0 0.0
  %1279 = vmatprep.subr.mxu0 0.0
  %1280 = vmatpush1.msra.mxu0 0.0
  %1281 = vmatprep.subr.mxu0 0.0
  %1282 = vmatpush1.msra.mxu0 0.0
  %1283 = vmatprep.subr.mxu0 0.0
  %1284 = vmatpush1.msra.mxu0 0.0
  %1285 = vmatprep.subr.mxu0 0.0
  %1286 = vmatpush1.msra.mxu0 0.0
  %1287 = vmatprep.subr.mxu0 0.0
  %1288 = vmatpush1.msra.mxu0 0.0
  %1289 = vmatprep.subr.mxu0 0.0
  %1290 = vmatpush1.msra.mxu0 0.0
  %1291 = vmatprep.subr.mxu0 0.0
  %1292 = vmatpush1.msra.mxu0 0.0
  %1293 = vmatprep.subr.mxu0 0.0
  %1294 = vmatpush1.msra.mxu0 0.0
  %1295 = vmatprep.mubr.f32.mxu0 0.0
  %1296 = vmatmul.mubr.f32.gmra.mrb[0].mxu0 %v1229
  %v1297 = vpop.f32.mrb[0].mxu0
  %v1298 = vadd.f32 0.0, %v1297
  %v1299 = vpop.f32.mrb[0].mxu0
  %1300 = vdwg.mxu0
  %v1301 = vadd.f32 %v1228, %v1298
  %v1302 = vxor.u32 %v1301, 2147483648
  %v1303 = vmul.f32 %v1302, 1.442695
  %v1304 = vpow.pop %v1303
  %v1305 = vadd.f32 %v1304, 1.0
  %v1306 = vrcp.pop %v1305
  %v1307 = vmul.f32 1.0, %v1306
  %v1308 = vtanh.pop %v1301
  %v1309 = vmul.f32 %v1307, %v1114
  %1311 = vrot.lane.b32.xlu0 %v1308, 64
  %v1312 = vpop.permute.xlu0 %1311
  %v1314 = vmul.f32 %v1307, %v1312
  %1316 = vrot.lane.b32.xlu0 %v1314, 32
  %v1317 = vpop.permute.xlu0 %1316
  %v1319 = vadd.f32 %v1309, %v1317
  %v1320 = vtanh.pop %v1319
  %1322 = vrot.lane.b32.xlu0 %v1320, 64
  %v1323 = vpop.permute.xlu0 %1322
  %v1325 = vmul.f32 %v1307, %v1323
  %1327 = vrot.lane.b32.xlu0 %v1325, 32
  %v1328 = vpop.permute.xlu0 %1327
  %1331 = vrot.lane.b32.xlu0 %v1226, 64
  %v1332 = vpop.permute.xlu0 %1331
  %v1334 = vsel %vm205, %v1328, %v1332
  %v1336 = vsel %vm309, %v1334, 0
  %1338 = vmatprep.subr.mxu0 0.0
  %1339 = vmatpush1.msra.mxu0 %v35
  %1340 = vmatprep.subr.mxu0 0.0
  %1341 = vmatpush1.msra.mxu0 %v36
  %1342 = vmatprep.subr.mxu0 0.0
  %1343 = vmatpush1.msra.mxu0 %v37
  %1344 = vmatprep.subr.mxu0 0.0
  %1345 = vmatpush1.msra.mxu0 %v38
  %1346 = vmatprep.subr.mxu0 0.0
  %1347 = vmatpush1.msra.mxu0 %v39
  %1348 = vmatprep.subr.mxu0 0.0
  %1349 = vmatpush1.msra.mxu0 %v40
  %1350 = vmatprep.subr.mxu0 0.0
  %1351 = vmatpush1.msra.mxu0 %v41
  %1352 = vmatprep.subr.mxu0 0.0
  %1353 = vmatpush1.msra.mxu0 %v42
  %1354 = vmatprep.subr.mxu0 0.0
  %1355 = vmatpush1.msra.mxu0 0.0
  %1356 = vmatprep.subr.mxu0 0.0
  %1357 = vmatpush1.msra.mxu0 0.0
  %1358 = vmatprep.subr.mxu0 0.0
  %1359 = vmatpush1.msra.mxu0 0.0
  %1360 = vmatprep.subr.mxu0 0.0
  %1361 = vmatpush1.msra.mxu0 0.0
  %1362 = vmatprep.subr.mxu0 0.0
  %1363 = vmatpush1.msra.mxu0 0.0
  %1364 = vmatprep.subr.mxu0 0.0
  %1365 = vmatpush1.msra.mxu0 0.0
  %1366 = vmatprep.subr.mxu0 0.0
  %1367 = vmatpush1.msra.mxu0 0.0
  %1368 = vmatprep.subr.mxu0 0.0
  %1369 = vmatpush1.msra.mxu0 0.0
  %1370 = vmatprep.subr.mxu0 0.0
  %1371 = vmatpush1.msra.mxu0 0.0
  %1372 = vmatprep.subr.mxu0 0.0
  %1373 = vmatpush1.msra.mxu0 0.0
  %1374 = vmatprep.subr.mxu0 0.0
  %1375 = vmatpush1.msra.mxu0 0.0
  %1376 = vmatprep.subr.mxu0 0.0
  %1377 = vmatpush1.msra.mxu0 0.0
  %1378 = vmatprep.subr.mxu0 0.0
  %1379 = vmatpush1.msra.mxu0 0.0
  %1380 = vmatprep.subr.mxu0 0.0
  %1381 = vmatpush1.msra.mxu0 0.0
  %1382 = vmatprep.subr.mxu0 0.0
  %1383 = vmatpush1.msra.mxu0 0.0
  %1384 = vmatprep.subr.mxu0 0.0
  %1385 = vmatpush1.msra.mxu0 0.0
  %1386 = vmatprep.subr.mxu0 0.0
  %1387 = vmatpush1.msra.mxu0 0.0
  %1388 = vmatprep.subr.mxu0 0.0
  %1389 = vmatpush1.msra.mxu0 0.0
  %1390 = vmatprep.subr.mxu0 0.0
  %1391 = vmatpush1.msra.mxu0 0.0
  %1392 = vmatprep.subr.mxu0 0.0
  %1393 = vmatpush1.msra.mxu0 0.0
  %1394 = vmatprep.subr.mxu0 0.0
  %1395 = vmatpush1.msra.mxu0 0.0
  %1396 = vmatprep.subr.mxu0 0.0
  %1397 = vmatpush1.msra.mxu0 0.0
  %1398 = vmatprep.subr.mxu0 0.0
  %1399 = vmatpush1.msra.mxu0 0.0
  %1400 = vmatprep.subr.mxu0 0.0
  %1401 = vmatpush1.msra.mxu0 0.0
  %1402 = vmatprep.mubr.f32.mxu0 0.0
  %1403 = vmatmul.mubr.f32.gmra.mrb[0].mxu0 %v1336
  %v1404 = vpop.f32.mrb[0].mxu0
  %v1405 = vadd.f32 %v202, %v1404
  %v1406 = vpop.f32.mrb[0].mxu0
  %1407 = vdwg.mxu0
  %v1408 = vxor.u32 %v1405, 2147483648
  %v1409 = vmul.f32 %v1408, 1.442695
  %v1410 = vpow.pop %v1409
  %v1411 = vadd.f32 %v1410, 1.0
  %v1412 = vrcp.pop %v1411
  %v1413 = vmul.f32 1.0, %v1412
  %v1414 = vtanh.pop %v1405
  %v1415 = vmul.f32 %v1413, %v1220
  %1417 = vrot.lane.b32.xlu0 %v1414, 64
  %v1418 = vpop.permute.xlu0 %1417
  %v1420 = vmul.f32 %v1413, %v1418
  %1422 = vrot.lane.b32.xlu0 %v1420, 32
  %v1423 = vpop.permute.xlu0 %1422
  %v1425 = vadd.f32 %v1415, %v1423
  %v1426 = vtanh.pop %v1425
  %1428 = vrot.lane.b32.xlu0 %v1426, 64
  %v1429 = vpop.permute.xlu0 %1428
  %v1431 = vmul.f32 %v1413, %v1429
  %s1432 = scalar_lea.vmem [#allocation2], 48
  %v1433 = vld [vmem:[%s1432] sm:$0xff]
  %v1434 = vsel %vm205, %v1328, 0
  %1436 = vmatprep.subr.mxu0 0.0
  %1437 = vmatpush1.msra.mxu0 %v31
  %1438 = vmatprep.subr.mxu0 0.0
  %1439 = vmatpush1.msra.mxu0 %v32
  %1440 = vmatprep.subr.mxu0 0.0
  %1441 = vmatpush1.msra.mxu0 %v33
  %1442 = vmatprep.subr.mxu0 0.0
  %1443 = vmatpush1.msra.mxu0 %v34
  %1444 = vmatprep.subr.mxu0 0.0
  %1445 = vmatpush1.msra.mxu0 0.0
  %1446 = vmatprep.subr.mxu0 0.0
  %1447 = vmatpush1.msra.mxu0 0.0
  %1448 = vmatprep.subr.mxu0 0.0
  %1449 = vmatpush1.msra.mxu0 0.0
  %1450 = vmatprep.subr.mxu0 0.0
  %1451 = vmatpush1.msra.mxu0 0.0
  %1452 = vmatprep.subr.mxu0 0.0
  %1453 = vmatpush1.msra.mxu0 0.0
  %1454 = vmatprep.subr.mxu0 0.0
  %1455 = vmatpush1.msra.mxu0 0.0
  %1456 = vmatprep.subr.mxu0 0.0
  %1457 = vmatpush1.msra.mxu0 0.0
  %1458 = vmatprep.subr.mxu0 0.0
  %1459 = vmatpush1.msra.mxu0 0.0
  %1460 = vmatprep.subr.mxu0 0.0
  %1461 = vmatpush1.msra.mxu0 0.0
  %1462 = vmatprep.subr.mxu0 0.0
  %1463 = vmatpush1.msra.mxu0 0.0
  %1464 = vmatprep.subr.mxu0 0.0
  %1465 = vmatpush1.msra.mxu0 0.0
  %1466 = vmatprep.subr.mxu0 0.0
  %1467 = vmatpush1.msra.mxu0 0.0
  %1468 = vmatprep.subr.mxu0 0.0
  %1469 = vmatpush1.msra.mxu0 0.0
  %1470 = vmatprep.subr.mxu0 0.0
  %1471 = vmatpush1.msra.mxu0 0.0
  %1472 = vmatprep.subr.mxu0 0.0
  %1473 = vmatpush1.msra.mxu0 0.0
  %1474 = vmatprep.subr.mxu0 0.0
  %1475 = vmatpush1.msra.mxu0 0.0
  %1476 = vmatprep.subr.mxu0 0.0
  %1477 = vmatpush1.msra.mxu0 0.0
  %1478 = vmatprep.subr.mxu0 0.0
  %1479 = vmatpush1.msra.mxu0 0.0
  %1480 = vmatprep.subr.mxu0 0.0
  %1481 = vmatpush1.msra.mxu0 0.0
  %1482 = vmatprep.subr.mxu0 0.0
  %1483 = vmatpush1.msra.mxu0 0.0
  %1484 = vmatprep.subr.mxu0 0.0
  %1485 = vmatpush1.msra.mxu0 0.0
  %1486 = vmatprep.subr.mxu0 0.0
  %1487 = vmatpush1.msra.mxu0 0.0
  %1488 = vmatprep.subr.mxu0 0.0
  %1489 = vmatpush1.msra.mxu0 0.0
  %1490 = vmatprep.subr.mxu0 0.0
  %1491 = vmatpush1.msra.mxu0 0.0
  %1492 = vmatprep.subr.mxu0 0.0
  %1493 = vmatpush1.msra.mxu0 0.0
  %1494 = vmatprep.subr.mxu0 0.0
  %1495 = vmatpush1.msra.mxu0 0.0
  %1496 = vmatprep.subr.mxu0 0.0
  %1497 = vmatpush1.msra.mxu0 0.0
  %1498 = vmatprep.subr.mxu0 0.0
  %1499 = vmatpush1.msra.mxu0 0.0
  %1500 = vmatprep.mubr.f32.mxu0 0.0
  %1501 = vmatmul.mubr.f32.gmra.mrb[0].mxu0 %v1434
  %v1502 = vpop.f32.mrb[0].mxu0
  %v1503 = vadd.f32 0.0, %v1502
  %v1504 = vpop.f32.mrb[0].mxu0
  %1505 = vdwg.mxu0
  %v1506 = vadd.f32 %v1433, %v1503
  %v1507 = vxor.u32 %v1506, 2147483648
  %v1508 = vmul.f32 %v1507, 1.442695
  %v1509 = vpow.pop %v1508
  %v1510 = vadd.f32 %v1509, 1.0
  %v1511 = vrcp.pop %v1510
  %v1512 = vmul.f32 1.0, %v1511
  %v1513 = vtanh.pop %v1506
  %v1514 = vmul.f32 %v1512, %v1319
  %1516 = vrot.lane.b32.xlu0 %v1513, 64
  %v1517 = vpop.permute.xlu0 %1516
  %v1519 = vmul.f32 %v1512, %v1517
  %1521 = vrot.lane.b32.xlu0 %v1519, 32
  %v1522 = vpop.permute.xlu0 %1521
  %v1524 = vadd.f32 %v1514, %v1522
  %v1525 = vtanh.pop %v1524
  %1527 = vrot.lane.b32.xlu0 %v1525, 64
  %v1528 = vpop.permute.xlu0 %1527
  %v1530 = vmul.f32 %v1512, %v1528
  %1532 = vrot.lane.b32.xlu0 %v1530, 32
  %v1533 = vpop.permute.xlu0 %1532
  %1536 = vrot.lane.b32.xlu0 %v1431, 64
  %v1537 = vpop.permute.xlu0 %1536
  %v1539 = vsel %vm205, %v1533, %v1537
  %v1541 = vsel %vm309, %v1539, 0
  %1543 = vmatprep.subr.mxu0 0.0
  %1544 = vmatpush1.msra.mxu0 %v35
  %1545 = vmatprep.subr.mxu0 0.0
  %1546 = vmatpush1.msra.mxu0 %v36
  %1547 = vmatprep.subr.mxu0 0.0
  %1548 = vmatpush1.msra.mxu0 %v37
  %1549 = vmatprep.subr.mxu0 0.0
  %1550 = vmatpush1.msra.mxu0 %v38
  %1551 = vmatprep.subr.mxu0 0.0
  %1552 = vmatpush1.msra.mxu0 %v39
  %1553 = vmatprep.subr.mxu0 0.0
  %1554 = vmatpush1.msra.mxu0 %v40
  %1555 = vmatprep.subr.mxu0 0.0
  %1556 = vmatpush1.msra.mxu0 %v41
  %1557 = vmatprep.subr.mxu0 0.0
  %1558 = vmatpush1.msra.mxu0 %v42
  %1559 = vmatprep.subr.mxu0 0.0
  %1560 = vmatpush1.msra.mxu0 0.0
  %1561 = vmatprep.subr.mxu0 0.0
  %1562 = vmatpush1.msra.mxu0 0.0
  %1563 = vmatprep.subr.mxu0 0.0
  %1564 = vmatpush1.msra.mxu0 0.0
  %1565 = vmatprep.subr.mxu0 0.0
  %1566 = vmatpush1.msra.mxu0 0.0
  %1567 = vmatprep.subr.mxu0 0.0
  %1568 = vmatpush1.msra.mxu0 0.0
  %1569 = vmatprep.subr.mxu0 0.0
  %1570 = vmatpush1.msra.mxu0 0.0
  %1571 = vmatprep.subr.mxu0 0.0
  %1572 = vmatpush1.msra.mxu0 0.0
  %1573 = vmatprep.subr.mxu0 0.0
  %1574 = vmatpush1.msra.mxu0 0.0
  %1575 = vmatprep.subr.mxu0 0.0
  %1576 = vmatpush1.msra.mxu0 0.0
  %1577 = vmatprep.subr.mxu0 0.0
  %1578 = vmatpush1.msra.mxu0 0.0
  %1579 = vmatprep.subr.mxu0 0.0
  %1580 = vmatpush1.msra.mxu0 0.0
  %1581 = vmatprep.subr.mxu0 0.0
  %1582 = vmatpush1.msra.mxu0 0.0
  %1583 = vmatprep.subr.mxu0 0.0
  %1584 = vmatpush1.msra.mxu0 0.0
  %1585 = vmatprep.subr.mxu0 0.0
  %1586 = vmatpush1.msra.mxu0 0.0
  %1587 = vmatprep.subr.mxu0 0.0
  %1588 = vmatpush1.msra.mxu0 0.0
  %1589 = vmatprep.subr.mxu0 0.0
  %1590 = vmatpush1.msra.mxu0 0.0
  %1591 = vmatprep.subr.mxu0 0.0
  %1592 = vmatpush1.msra.mxu0 0.0
  %1593 = vmatprep.subr.mxu0 0.0
  %1594 = vmatpush1.msra.mxu0 0.0
  %1595 = vmatprep.subr.mxu0 0.0
  %1596 = vmatpush1.msra.mxu0 0.0
  %1597 = vmatprep.subr.mxu0 0.0
  %1598 = vmatpush1.msra.mxu0 0.0
  %1599 = vmatprep.subr.mxu0 0.0
  %1600 = vmatpush1.msra.mxu0 0.0
  %1601 = vmatprep.subr.mxu0 0.0
  %1602 = vmatpush1.msra.mxu0 0.0
  %1603 = vmatprep.subr.mxu0 0.0
  %1604 = vmatpush1.msra.mxu0 0.0
  %1605 = vmatprep.subr.mxu0 0.0
  %1606 = vmatpush1.msra.mxu0 0.0
  %1607 = vmatprep.mubr.f32.mxu0 0.0
  %1608 = vmatmul.mubr.f32.gmra.mrb[0].mxu0 %v1541
  %v1609 = vpop.f32.mrb[0].mxu0
  %v1610 = vadd.f32 %v202, %v1609
  %v1611 = vpop.f32.mrb[0].mxu0
  %1612 = vdwg.mxu0
  %v1613 = vxor.u32 %v1610, 2147483648
  %v1614 = vmul.f32 %v1613, 1.442695
  %v1615 = vpow.pop %v1614
  %v1616 = vadd.f32 %v1615, 1.0
  %v1617 = vrcp.pop %v1616
  %v1618 = vmul.f32 1.0, %v1617
  %v1619 = vtanh.pop %v1610
  %v1620 = vmul.f32 %v1618, %v1425
  %1622 = vrot.lane.b32.xlu0 %v1619, 64
  %v1623 = vpop.permute.xlu0 %1622
  %v1625 = vmul.f32 %v1618, %v1623
  %1627 = vrot.lane.b32.xlu0 %v1625, 32
  %v1628 = vpop.permute.xlu0 %1627
  %v1630 = vadd.f32 %v1620, %v1628
  %v1631 = vtanh.pop %v1630
  %1633 = vrot.lane.b32.xlu0 %v1631, 64
  %v1634 = vpop.permute.xlu0 %1633
  %v1636 = vmul.f32 %v1618, %v1634
  %s1637 = scalar_lea.vmem [#allocation2], 56
  %v1638 = vld [vmem:[%s1637] sm:$0xff]
  %v1639 = vsel %vm205, %v1533, 0
  %1641 = vmatprep.subr.mxu0 0.0
  %1642 = vmatpush1.msra.mxu0 %v31
  %1643 = vmatprep.subr.mxu0 0.0
  %1644 = vmatpush1.msra.mxu0 %v32
  %1645 = vmatprep.subr.mxu0 0.0
  %1646 = vmatpush1.msra.mxu0 %v33
  %1647 = vmatprep.subr.mxu0 0.0
  %1648 = vmatpush1.msra.mxu0 %v34
  %1649 = vmatprep.subr.mxu0 0.0
  %1650 = vmatpush1.msra.mxu0 0.0
  %1651 = vmatprep.subr.mxu0 0.0
  %1652 = vmatpush1.msra.mxu0 0.0
  %1653 = vmatprep.subr.mxu0 0.0
  %1654 = vmatpush1.msra.mxu0 0.0
  %1655 = vmatprep.subr.mxu0 0.0
  %1656 = vmatpush1.msra.mxu0 0.0
  %1657 = vmatprep.subr.mxu0 0.0
  %1658 = vmatpush1.msra.mxu0 0.0
  %1659 = vmatprep.subr.mxu0 0.0
  %1660 = vmatpush1.msra.mxu0 0.0
  %1661 = vmatprep.subr.mxu0 0.0
  %1662 = vmatpush1.msra.mxu0 0.0
  %1663 = vmatprep.subr.mxu0 0.0
  %1664 = vmatpush1.msra.mxu0 0.0
  %1665 = vmatprep.subr.mxu0 0.0
  %1666 = vmatpush1.msra.mxu0 0.0
  %1667 = vmatprep.subr.mxu0 0.0
  %1668 = vmatpush1.msra.mxu0 0.0
  %1669 = vmatprep.subr.mxu0 0.0
  %1670 = vmatpush1.msra.mxu0 0.0
  %1671 = vmatprep.subr.mxu0 0.0
  %1672 = vmatpush1.msra.mxu0 0.0
  %1673 = vmatprep.subr.mxu0 0.0
  %1674 = vmatpush1.msra.mxu0 0.0
  %1675 = vmatprep.subr.mxu0 0.0
  %1676 = vmatpush1.msra.mxu0 0.0
  %1677 = vmatprep.subr.mxu0 0.0
  %1678 = vmatpush1.msra.mxu0 0.0
  %1679 = vmatprep.subr.mxu0 0.0
  %1680 = vmatpush1.msra.mxu0 0.0
  %1681 = vmatprep.subr.mxu0 0.0
  %1682 = vmatpush1.msra.mxu0 0.0
  %1683 = vmatprep.subr.mxu0 0.0
  %1684 = vmatpush1.msra.mxu0 0.0
  %1685 = vmatprep.subr.mxu0 0.0
  %1686 = vmatpush1.msra.mxu0 0.0
  %1687 = vmatprep.subr.mxu0 0.0
  %1688 = vmatpush1.msra.mxu0 0.0
  %1689 = vmatprep.subr.mxu0 0.0
  %1690 = vmatpush1.msra.mxu0 0.0
  %1691 = vmatprep.subr.mxu0 0.0
  %1692 = vmatpush1.msra.mxu0 0.0
  %1693 = vmatprep.subr.mxu0 0.0
  %1694 = vmatpush1.msra.mxu0 0.0
  %1695 = vmatprep.subr.mxu0 0.0
  %1696 = vmatpush1.msra.mxu0 0.0
  %1697 = vmatprep.subr.mxu0 0.0
  %1698 = vmatpush1.msra.mxu0 0.0
  %1699 = vmatprep.subr.mxu0 0.0
  %1700 = vmatpush1.msra.mxu0 0.0
  %1701 = vmatprep.subr.mxu0 0.0
  %1702 = vmatpush1.msra.mxu0 0.0
  %1703 = vmatprep.subr.mxu0 0.0
  %1704 = vmatpush1.msra.mxu0 0.0
  %1705 = vmatprep.mubr.f32.mxu0 0.0
  %1706 = vmatmul.mubr.f32.gmra.mrb[0].mxu0 %v1639
  %v1707 = vpop.f32.mrb[0].mxu0
  %v1708 = vadd.f32 0.0, %v1707
  %v1709 = vpop.f32.mrb[0].mxu0
  %1710 = vdwg.mxu0
  %v1711 = vadd.f32 %v1638, %v1708
  %v1712 = vxor.u32 %v1711, 2147483648
  %v1713 = vmul.f32 %v1712, 1.442695
  %v1714 = vpow.pop %v1713
  %v1715 = vadd.f32 %v1714, 1.0
  %v1716 = vrcp.pop %v1715
  %v1717 = vmul.f32 1.0, %v1716
  %v1718 = vtanh.pop %v1711
  %v1719 = vmul.f32 %v1717, %v1524
  %1721 = vrot.lane.b32.xlu0 %v1718, 64
  %v1722 = vpop.permute.xlu0 %1721
  %v1724 = vmul.f32 %v1717, %v1722
  %1726 = vrot.lane.b32.xlu0 %v1724, 32
  %v1727 = vpop.permute.xlu0 %1726
  %v1729 = vadd.f32 %v1719, %v1727
  %v1730 = vtanh.pop %v1729
  %1732 = vrot.lane.b32.xlu0 %v1730, 64
  %v1733 = vpop.permute.xlu0 %1732
  %v1735 = vmul.f32 %v1717, %v1733
  %1737 = vrot.lane.b32.xlu0 %v1735, 32
  %v1738 = vpop.permute.xlu0 %1737
  %1741 = vrot.lane.b32.xlu0 %v1636, 64
  %v1742 = vpop.permute.xlu0 %1741
  %v1744 = vsel %vm205, %v1738, %v1742
  %v1746 = vsel %vm309, %v1744, 0
  %1748 = vmatprep.subr.mxu0 0.0
  %1749 = vmatpush1.msra.mxu0 %v35
  %1750 = vmatprep.subr.mxu0 0.0
  %1751 = vmatpush1.msra.mxu0 %v36
  %1752 = vmatprep.subr.mxu0 0.0
  %1753 = vmatpush1.msra.mxu0 %v37
  %1754 = vmatprep.subr.mxu0 0.0
  %1755 = vmatpush1.msra.mxu0 %v38
  %1756 = vmatprep.subr.mxu0 0.0
  %1757 = vmatpush1.msra.mxu0 %v39
  %1758 = vmatprep.subr.mxu0 0.0
  %1759 = vmatpush1.msra.mxu0 %v40
  %1760 = vmatprep.subr.mxu0 0.0
  %1761 = vmatpush1.msra.mxu0 %v41
  %1762 = vmatprep.subr.mxu0 0.0
  %1763 = vmatpush1.msra.mxu0 %v42
  %1764 = vmatprep.subr.mxu0 0.0
  %1765 = vmatpush1.msra.mxu0 0.0
  %1766 = vmatprep.subr.mxu0 0.0
  %1767 = vmatpush1.msra.mxu0 0.0
  %1768 = vmatprep.subr.mxu0 0.0
  %1769 = vmatpush1.msra.mxu0 0.0
  %1770 = vmatprep.subr.mxu0 0.0
  %1771 = vmatpush1.msra.mxu0 0.0
  %1772 = vmatprep.subr.mxu0 0.0
  %1773 = vmatpush1.msra.mxu0 0.0
  %1774 = vmatprep.subr.mxu0 0.0
  %1775 = vmatpush1.msra.mxu0 0.0
  %1776 = vmatprep.subr.mxu0 0.0
  %1777 = vmatpush1.msra.mxu0 0.0
  %1778 = vmatprep.subr.mxu0 0.0
  %1779 = vmatpush1.msra.mxu0 0.0
  %1780 = vmatprep.subr.mxu0 0.0
  %1781 = vmatpush1.msra.mxu0 0.0
  %1782 = vmatprep.subr.mxu0 0.0
  %1783 = vmatpush1.msra.mxu0 0.0
  %1784 = vmatprep.subr.mxu0 0.0
  %1785 = vmatpush1.msra.mxu0 0.0
  %1786 = vmatprep.subr.mxu0 0.0
  %1787 = vmatpush1.msra.mxu0 0.0
  %1788 = vmatprep.subr.mxu0 0.0
  %1789 = vmatpush1.msra.mxu0 0.0
  %1790 = vmatprep.subr.mxu0 0.0
  %1791 = vmatpush1.msra.mxu0 0.0
  %1792 = vmatprep.subr.mxu0 0.0
  %1793 = vmatpush1.msra.mxu0 0.0
  %1794 = vmatprep.subr.mxu0 0.0
  %1795 = vmatpush1.msra.mxu0 0.0
  %1796 = vmatprep.subr.mxu0 0.0
  %1797 = vmatpush1.msra.mxu0 0.0
  %1798 = vmatprep.subr.mxu0 0.0
  %1799 = vmatpush1.msra.mxu0 0.0
  %1800 = vmatprep.subr.mxu0 0.0
  %1801 = vmatpush1.msra.mxu0 0.0
  %1802 = vmatprep.subr.mxu0 0.0
  %1803 = vmatpush1.msra.mxu0 0.0
  %1804 = vmatprep.subr.mxu0 0.0
  %1805 = vmatpush1.msra.mxu0 0.0
  %1806 = vmatprep.subr.mxu0 0.0
  %1807 = vmatpush1.msra.mxu0 0.0
  %1808 = vmatprep.subr.mxu0 0.0
  %1809 = vmatpush1.msra.mxu0 0.0
  %1810 = vmatprep.subr.mxu0 0.0
  %1811 = vmatpush1.msra.mxu0 0.0
  %1812 = vmatprep.mubr.f32.mxu0 0.0
  %1813 = vmatmul.mubr.f32.gmra.mrb[0].mxu0 %v1746
  %v1814 = vpop.f32.mrb[0].mxu0
  %v1815 = vadd.f32 %v202, %v1814
  %v1816 = vpop.f32.mrb[0].mxu0
  %1817 = vdwg.mxu0
  %v1818 = vxor.u32 %v1815, 2147483648
  %v1819 = vmul.f32 %v1818, 1.442695
  %v1820 = vpow.pop %v1819
  %v1821 = vadd.f32 %v1820, 1.0
  %v1822 = vrcp.pop %v1821
  %v1823 = vmul.f32 1.0, %v1822
  %v1824 = vtanh.pop %v1815
  %v1825 = vmul.f32 %v1823, %v1630
  %1827 = vrot.lane.b32.xlu0 %v1824, 64
  %v1828 = vpop.permute.xlu0 %1827
  %v1830 = vmul.f32 %v1823, %v1828
  %1832 = vrot.lane.b32.xlu0 %v1830, 32
  %v1833 = vpop.permute.xlu0 %1832
  %v1835 = vadd.f32 %v1825, %v1833
  %v1836 = vtanh.pop %v1835
  %1838 = vrot.lane.b32.xlu0 %v1836, 64
  %v1839 = vpop.permute.xlu0 %1838
  %v1841 = vmul.f32 %v1823, %v1839
  %v1842 = vld [vmem:[%s6] sm:$0xff]
  %v1843 = vld [vmem:[%s6 + $0x8] sm:$0xff]
  %v1844 = vld [vmem:[%s6 + $0x10] sm:$0xff]
  %v1845 = vld [vmem:[%s6 + $0x18] sm:$0xff]
  %v1846 = vld [vmem:[#allocation3] sm:$0x1]
  %v1848 = vlaneseq
  %v1849 = vshrl.u32 %v1848, 7
  %v1850 = vsub.s32 0, %v1849
  %v1851 = vrot.slane %v1846, %v1850
  %1854 = vrot.lane.b32.xlu0 %v1841, 32
  %v1855 = vpop.permute.xlu0 %1854
  %v1856 = vsel %vm205, %v1855, 0
  %1858 = vmatprep.subr.mxu0 0.0
  %1859 = vmatpush1.msra.mxu0 %v1842
  %1860 = vmatprep.subr.mxu0 0.0
  %1861 = vmatpush1.msra.mxu0 %v1843
  %1862 = vmatprep.subr.mxu0 0.0
  %1863 = vmatpush1.msra.mxu0 %v1844
  %1864 = vmatprep.subr.mxu0 0.0
  %1865 = vmatpush1.msra.mxu0 %v1845
  %1866 = vmatprep.subr.mxu0 0.0
  %1867 = vmatpush1.msra.mxu0 0.0
  %1868 = vmatprep.subr.mxu0 0.0
  %1869 = vmatpush1.msra.mxu0 0.0
  %1870 = vmatprep.subr.mxu0 0.0
  %1871 = vmatpush1.msra.mxu0 0.0
  %1872 = vmatprep.subr.mxu0 0.0
  %1873 = vmatpush1.msra.mxu0 0.0
  %1874 = vmatprep.subr.mxu0 0.0
  %1875 = vmatpush1.msra.mxu0 0.0
  %1876 = vmatprep.subr.mxu0 0.0
  %1877 = vmatpush1.msra.mxu0 0.0
  %1878 = vmatprep.subr.mxu0 0.0
  %1879 = vmatpush1.msra.mxu0 0.0
  %1880 = vmatprep.subr.mxu0 0.0
  %1881 = vmatpush1.msra.mxu0 0.0
  %1882 = vmatprep.subr.mxu0 0.0
  %1883 = vmatpush1.msra.mxu0 0.0
  %1884 = vmatprep.subr.mxu0 0.0
  %1885 = vmatpush1.msra.mxu0 0.0
  %1886 = vmatprep.subr.mxu0 0.0
  %1887 = vmatpush1.msra.mxu0 0.0
  %1888 = vmatprep.subr.mxu0 0.0
  %1889 = vmatpush1.msra.mxu0 0.0
  %1890 = vmatprep.subr.mxu0 0.0
  %1891 = vmatpush1.msra.mxu0 0.0
  %1892 = vmatprep.subr.mxu0 0.0
  %1893 = vmatpush1.msra.mxu0 0.0
  %1894 = vmatprep.subr.mxu0 0.0
  %1895 = vmatpush1.msra.mxu0 0.0
  %1896 = vmatprep.subr.mxu0 0.0
  %1897 = vmatpush1.msra.mxu0 0.0
  %1898 = vmatprep.subr.mxu0 0.0
  %1899 = vmatpush1.msra.mxu0 0.0
  %1900 = vmatprep.subr.mxu0 0.0
  %1901 = vmatpush1.msra.mxu0 0.0
  %1902 = vmatprep.subr.mxu0 0.0
  %1903 = vmatpush1.msra.mxu0 0.0
  %1904 = vmatprep.subr.mxu0 0.0
  %1905 = vmatpush1.msra.mxu0 0.0
  %1906 = vmatprep.subr.mxu0 0.0
  %1907 = vmatpush1.msra.mxu0 0.0
  %1908 = vmatprep.subr.mxu0 0.0
  %1909 = vmatpush1.msra.mxu0 0.0
  %1910 = vmatprep.subr.mxu0 0.0
  %1911 = vmatpush1.msra.mxu0 0.0
  %1912 = vmatprep.subr.mxu0 0.0
  %1913 = vmatpush1.msra.mxu0 0.0
  %1914 = vmatprep.subr.mxu0 0.0
  %1915 = vmatpush1.msra.mxu0 0.0
  %1916 = vmatprep.subr.mxu0 0.0
  %1917 = vmatpush1.msra.mxu0 0.0
  %1918 = vmatprep.subr.mxu0 0.0
  %1919 = vmatpush1.msra.mxu0 0.0
  %1920 = vmatprep.subr.mxu0 0.0
  %1921 = vmatpush1.msra.mxu0 0.0
  %1922 = vmatprep.mubr.f32.mxu0 0.0
  %1923 = vmatmul.mubr.f32.gmra.mrb[0].mxu0 %v1856
  %v1924 = vpop.f32.mrb[0].mxu0
  %v1925 = vadd.f32 %v1851, %v1924
  %v1926 = vpop.f32.mrb[0].mxu0
  %1927 = vdwg.mxu0
  %vm1928 = vcmask 7168
  %1929 = vst.msk [vmem:[%s8] sm:$0xff] %vm1928, %v1925
  // Predicated region
  $region34: #{lstm_model_forward.1} parent=0 // pred_check
    _
  $region35: #{lstm_model_forward.1} parent=0 // pred_check_branch
    %1931 = sbr.rel (0) target = $region37
  $region36: #{lstm_model_forward.1} parent=0 // pred_region
    _
  $region37: #{lstm_model_forward.1} parent=0 // pred_fallthru
    _
  // Predicated region
  $region38: #{lstm_model_forward.1} parent=0 // pred_check
    _
  $region39: #{lstm_model_forward.1} parent=0 // pred_check_branch
    %1933 = sbr.rel (0) target = $region41
  $region40: #{lstm_model_forward.1} parent=0 // pred_region
    _
  $region41: #{lstm_model_forward.1} parent=0 // pred_fallthru
    _

</llo_original>
